<compile_context>
chip_gen: v5e
topology: v5e:2x2
jax: 0.10.0
libtpu: 0.0.40
codegen_flags: <defaults>
</compile_context>

<pallas_src>
import functools

import jax
import jax.numpy as jnp
from jax.experimental import pallas as pl
from jax.experimental.pallas import tpu as pltpu


def _transformer_encoder_kernel(
    x_full_ref, x_rows_ref,
    ln1_w_ref, ln1_b_ref,
    wq_ref, bq_ref, wk_ref, bk_ref, wv_ref, bv_ref,
    wo_ref, bo_ref,
    ln2_w_ref, ln2_b_ref,
    w1_ref, b1_ref,
    w2_ref, b2_ref,
    out_ref,
    qh_ref, kh_ref, vh_ref, oh_ref,
    *, num_heads: int, head_dim: int,
):
    eps = 1e-5
    H, hd = num_heads, head_dim
    _, N, D = x_full_ref.shape
    _, TN, _ = x_rows_ref.shape

    def layer_norm(v, w_ref, b_ref):
        # Two-pass variance: avoids E[x^2] - mu^2 cancellation on the
        # post-residual (second) LayerNorm.
        mu = jnp.mean(v, axis=-1, keepdims=True)
        c = v - mu
        var = jnp.mean(c * c, axis=-1, keepdims=True)
        return c * jax.lax.rsqrt(var + eps) * w_ref[...] + b_ref[...]

    def dense(a_bf, w_ref, b_ref):
        # bf16 operands on the MXU, f32 accumulation, f32 bias add.
        return jnp.dot(a_bf, w_ref[...],
                       preferred_element_type=jnp.float32) + b_ref[...]

    def split_heads(t_f32, rows):
        # (rows, D) -> (H, rows, hd): one bf16 cast + one reshape + one
        # transpose (single XLU relayout) instead of H masked lane slices.
        return jnp.swapaxes(
            t_f32.astype(jnp.bfloat16).reshape(rows, H, hd), 0, 1)

    # ---------------- pre-norm multi-head attention ----------------
    x_all = x_full_ref[0].astype(jnp.float32)                 # (N, D)
    xn_all_bf = layer_norm(x_all, ln1_w_ref, ln1_b_ref).astype(jnp.bfloat16)
    if TN == N:
        x_rows, xn_rows_bf = x_all, xn_all_bf                 # single row block
    else:
        x_rows = x_rows_ref[0].astype(jnp.float32)            # (TN, D)
        xn_rows_bf = layer_norm(x_rows, ln1_w_ref,
                                ln1_b_ref).astype(jnp.bfloat16)

    # q-scaling (head_dim**-0.5) is folded into wq/bq by prepare_params().
    qh_ref[...] = split_heads(dense(xn_rows_bf, wq_ref, bq_ref), TN)
    kh_ref[...] = split_heads(dense(xn_all_bf, wk_ref, bk_ref), N)
    vh_ref[...] = split_heads(dense(xn_all_bf, wv_ref, bv_ref), N)

    # Per-head loop: only one (TN, N) score tile is live at a time.  head_dim
    # (< 128) under-fills the MXU contraction but QK^T / PV are a small
    # fraction of total FLOPs, so head_dim is intentionally not padded.
    @pl.loop(0, H)
    def _(h):
        q_h = qh_ref[h]                                        # (TN, hd) bf16
        k_h = kh_ref[h]                                        # (N,  hd) bf16
        v_h = vh_ref[h]                                        # (N,  hd) bf16
        s = jax.lax.dot_general(q_h, k_h, (((1,), (1,)), ((), ())),
                                preferred_element_type=jnp.float32)  # (TN, N)
        s = s - jnp.max(s, axis=-1, keepdims=True)
        e = jnp.exp(s)
        # approx reciprocal runs on the EUP; attention rows sum to 1 +/- ~1e-3
        # which is fine for inference.
        p = e * pl.reciprocal(jnp.sum(e, axis=-1, keepdims=True), approx=True)
        o_h = jnp.dot(p.astype(jnp.bfloat16), v_h,
                      preferred_element_type=jnp.float32)      # (TN, hd)
        oh_ref[h] = o_h.astype(jnp.bfloat16)

    # (H, TN, hd) -> (TN, D): one transpose -> lane-dense slab (no per-head
    # concatenate of sub-128-lane pieces).
    mha = jnp.swapaxes(oh_ref[...], 0, 1).reshape(TN, D)       # bf16
    y = x_rows + dense(mha, wo_ref, bo_ref)                    # residual 1, f32

    # ---------------- pre-norm feed-forward (SiLU) ----------------
    yn_bf = layer_norm(y, ln2_w_ref, ln2_b_ref).astype(jnp.bfloat16)
    h1 = dense(yn_bf, w1_ref, b1_ref)                          # (TN, F) f32
    h1 = (h1 * jax.nn.sigmoid(h1)).astype(jnp.bfloat16)        # SiLU -> bf16
    out_ref[0] = (y + dense(h1, w2_ref, b2_ref)).astype(out_ref.dtype)


def prepare_params(params, *, num_heads, matmul_dtype=jnp.bfloat16):
    """One-time weight preprocessing (do this at model load, not per call).

    Splits the fused qkv projection into three tile-aligned (D, D) weights,
    folds the q-scaling (head_dim**-0.5) into wq/bq, and casts the matmul
    weights to bf16 (halves weight DMA).  Biases / LN params stay f32.
    """
    D = params["wo"].shape[0]
    hd = D // num_heads
    scale = hd ** -0.5
    wqkv, bqkv = params["wqkv"], params["bqkv"]
    return {
        "ln1_w": params["ln1_w"], "ln1_b": params["ln1_b"],
        "wq": (wqkv[:, :D] * scale).astype(matmul_dtype),
        "bq": bqkv[:, :D] * scale,
        "wk": wqkv[:, D:2 * D].astype(matmul_dtype),
        "bk": bqkv[:, D:2 * D],
        "wv": wqkv[:, 2 * D:].astype(matmul_dtype),
        "bv": bqkv[:, 2 * D:],
        "wo": params["wo"].astype(matmul_dtype), "bo": params["bo"],
        "ln2_w": params["ln2_w"], "ln2_b": params["ln2_b"],
        "w1": params["w1"].astype(matmul_dtype), "b1": params["b1"],
        "w2": params["w2"].astype(matmul_dtype), "b2": params["b2"],
    }


def transformer_encoder(x, params, *, num_heads, row_blocks=None,
                        vmem_limit_bytes=64 * 1024 * 1024,
                        single_buffer_weights=None):
    """x: (B, N, D) float32.  params: output of prepare_params()."""
    B, N, D = x.shape
    assert D % num_heads == 0
    F = params["w1"].shape[1]
    hd = D // num_heads

    if row_blocks is None:
        # Give v7x's two TensorCores >=2 parallel grid steps even at batch 1.
        row_blocks = 2 if (B == 1 and N % 256 == 0) else 1
    assert N % row_blocks == 0
    TN = N // row_blocks
    assert TN == N or TN % 8 == 0, "row block must stay sublane-aligned"

    w_itemsize = params["wq"].dtype.itemsize
    weight_bytes = (4 * D * D + 2 * D * F) * w_itemsize
    if single_buffer_weights is None:
        # Only worth it when double-buffered weights would eat meaningful VMEM
        # (large MobileViT configs on v7x's 64 MiB).
        single_buffer_weights = weight_bytes > (8 << 20)

    def wspec(shape):
        if single_buffer_weights:
            return pl.BlockSpec(shape, lambda b, n: (0,) * len(shape),
                                pipeline_mode=pl.Buffered(1))
        return pl.BlockSpec(shape, lambda b, n: (0,) * len(shape))

    kernel = functools.partial(_transformer_encoder_kernel,
                               num_heads=num_heads, head_dim=hd)

    # Advisory cost estimate so XLA schedules neighbors around this call.
    flops = 2 * B * N * (4 * D * D + 2 * D * F) + 4 * B * num_heads * N * N * hd
    flops += (row_blocks - 1) * 4 * B * N * D * D          # recomputed K/V
    transcendentals = B * (num_heads * N * N + N * F)
    bytes_accessed = ((2 + row_blocks) * 4 * B * N * D
                      + weight_bytes + 4 * (8 * D + F))

    return pl.pallas_call(
        kernel,
        out_shape=jax.ShapeDtypeStruct((B, N, D), x.dtype),
        grid_spec=pltpu.PrefetchScalarGridSpec(
            num_scalar_prefetch=0,
            grid=(B, row_blocks),
            in_specs=[
                pl.BlockSpec((1, N, D), lambda b, n: (b, 0, 0)),   # x full (K/V)
                pl.BlockSpec((1, TN, D), lambda b, n: (b, n, 0)),  # x rows (Q/res)
                wspec((1, D)), wspec((1, D)),                      # ln1 w, b
                wspec((D, D)), wspec((1, D)),                      # wq (pre-scaled), bq
                wspec((D, D)), wspec((1, D)),                      # wk, bk
                wspec((D, D)), wspec((1, D)),                      # wv, bv
                wspec((D, D)), wspec((1, D)),                      # out_proj w, b
                wspec((1, D)), wspec((1, D)),                      # ln2 w, b
                wspec((D, F)), wspec((1, F)),                      # ffn1 w, b
                wspec((F, D)), wspec((1, D)),                      # ffn2 w, b
            ],
            out_specs=pl.BlockSpec((1, TN, D), lambda b, n: (b, n, 0)),
            scratch_shapes=[
                pltpu.VMEM((num_heads, TN, hd), jnp.bfloat16),     # q heads
                pltpu.VMEM((num_heads, N, hd), jnp.bfloat16),      # k heads
                pltpu.VMEM((num_heads, N, hd), jnp.bfloat16),      # v heads
                pltpu.VMEM((num_heads, TN, hd), jnp.bfloat16),     # per-head out
            ],
        ),
        compiler_params=pltpu.CompilerParams(
            dimension_semantics=("parallel", "parallel"),
            vmem_limit_bytes=vmem_limit_bytes),
        cost_estimate=pl.CostEstimate(
            flops=int(flops),
            transcendentals=int(transcendentals),
            bytes_accessed=int(bytes_accessed)),
    )(
        x, x,
        params["ln1_w"], params["ln1_b"],
        params["wq"], params["bq"], params["wk"], params["bk"],
        params["wv"], params["bv"],
        params["wo"], params["bo"],
        params["ln2_w"], params["ln2_b"],
        params["w1"], params["b1"],
        params["w2"], params["b2"],
    )


def init_params(key, embed_dim, ffn_dim):
    """Raw f32 parameters mirroring the PyTorch module layout."""
    D, F = embed_dim, ffn_dim
    ks = jax.random.split(key, 8)
    s = 0.02
    return {
        "ln1_w": jnp.ones((1, D), jnp.float32),
        "ln1_b": jnp.zeros((1, D), jnp.float32),
        "wqkv": s * jax.random.normal(ks[0], (D, 3 * D), jnp.float32),
        "bqkv": s * jax.random.normal(ks[1], (1, 3 * D), jnp.float32),
        "wo": s * jax.random.normal(ks[2], (D, D), jnp.float32),
        "bo": s * jax.random.normal(ks[3], (1, D), jnp.float32),
        "ln2_w": jnp.ones((1, D), jnp.float32),
        "ln2_b": jnp.zeros((1, D), jnp.float32),
        "w1": s * jax.random.normal(ks[4], (D, F), jnp.float32),
        "b1": s * jax.random.normal(ks[5], (1, F), jnp.float32),
        "w2": s * jax.random.normal(ks[6], (F, D), jnp.float32),
        "b2": s * jax.random.normal(ks[7], (1, D), jnp.float32),
    }


def _reference(x, p, num_heads):
    """Pure-JAX f32 reference mirroring the PyTorch forward (eval mode)."""
    B, N, D = x.shape
    hd = D // num_heads
    eps = 1e-5

    def ln(v, w, b):
        mu = v.mean(-1, keepdims=True)
        var = ((v - mu) ** 2).mean(-1, keepdims=True)
        return (v - mu) / jnp.sqrt(var + eps) * w[0] + b[0]

    xn = ln(x, p["ln1_w"], p["ln1_b"])
    qkv = xn @ p["wqkv"] + p["bqkv"][0]                     # (B, N, 3D)
    qkv = qkv.reshape(B, N, 3, num_heads, hd).transpose(0, 3, 2, 1, 4)
    q, k, v = qkv[:, :, 0], qkv[:, :, 1], qkv[:, :, 2]      # (B, H, N, hd)
    q = q * hd ** -0.5
    attn = jax.nn.softmax(q @ k.transpose(0, 1, 3, 2), axis=-1)
    o = (attn @ v).transpose(0, 2, 1, 3).reshape(B, N, D)
    o = o @ p["wo"] + p["bo"][0]
    x = x + o
    xn2 = ln(x, p["ln2_w"], p["ln2_b"])
    h1 = xn2 @ p["w1"] + p["b1"][0]
    h1 = h1 * jax.nn.sigmoid(h1)
    h2 = h1 @ p["w2"] + p["b2"][0]
    return x + h2


if __name__ == "__main__":
    B, N, D, H, F = 2, 16, 32, 4, 64   # batch, n_patches, embed_dim, heads, ffn
    key = jax.random.PRNGKey(0)
    kx, kp = jax.random.split(key)
    x = jax.random.normal(kx, (B, N, D), jnp.float32)
    raw = init_params(kp, D, F)
    params = prepare_params(raw, num_heads=H)   # one-time weight prep

    ref = _reference(x, raw, H)

    # Default path (one row block per batch element).
    fwd = jax.jit(functools.partial(transformer_encoder, num_heads=H))
    out = jax.block_until_ready(fwd(x, params))
    assert out.shape == (B, N, D)
    # Tolerance: bf16 MXU operands + approx softmax reciprocal (error << 1e-2).
    assert jnp.allclose(out, ref, atol=1e-2, rtol=1e-2), "mismatch vs reference"

    # Row-tiled path (second parallel grid axis, as used for v7x batch-1).
    fwd2 = jax.jit(functools.partial(transformer_encoder, num_heads=H,
                                     row_blocks=2))
    out2 = jax.block_until_ready(fwd2(x, params))
    assert jnp.allclose(out2, ref, atol=1e-2, rtol=1e-2), "row-tiled mismatch"

    print("KERNEL_OK")
</pallas_src>

<mosaic_0001>
module attributes {stable_mosaic.version = 11 : i64} {
  func.func @_transformer_encoder_kernel(%arg0: i32, %arg1: i32, %arg2: memref<1x16x32xf32, #tpu.memory_space<vmem>>, %arg3: memref<1x16x32xf32, #tpu.memory_space<vmem>>, %arg4: memref<1x32xf32, #tpu.memory_space<vmem>>, %arg5: memref<1x32xf32, #tpu.memory_space<vmem>>, %arg6: memref<32x32xbf16, #tpu.memory_space<vmem>>, %arg7: memref<1x32xf32, #tpu.memory_space<vmem>>, %arg8: memref<32x32xbf16, #tpu.memory_space<vmem>>, %arg9: memref<1x32xf32, #tpu.memory_space<vmem>>, %arg10: memref<32x32xbf16, #tpu.memory_space<vmem>>, %arg11: memref<1x32xf32, #tpu.memory_space<vmem>>, %arg12: memref<32x32xbf16, #tpu.memory_space<vmem>>, %arg13: memref<1x32xf32, #tpu.memory_space<vmem>>, %arg14: memref<1x32xf32, #tpu.memory_space<vmem>>, %arg15: memref<1x32xf32, #tpu.memory_space<vmem>>, %arg16: memref<32x64xbf16, #tpu.memory_space<vmem>>, %arg17: memref<1x64xf32, #tpu.memory_space<vmem>>, %arg18: memref<64x32xbf16, #tpu.memory_space<vmem>>, %arg19: memref<1x32xf32, #tpu.memory_space<vmem>>, %arg20: memref<1x16x32xf32, #tpu.memory_space<vmem>>, %arg21: memref<4x16x8xbf16, #tpu.memory_space<vmem>>, %arg22: memref<4x16x8xbf16, #tpu.memory_space<vmem>>, %arg23: memref<4x16x8xbf16, #tpu.memory_space<vmem>>, %arg24: memref<4x16x8xbf16, #tpu.memory_space<vmem>>) attributes {dimension_semantics = [#tpu.dimension_semantics<parallel>, #tpu.dimension_semantics<parallel>], iteration_bounds = array<i64: 2, 1>, scalar_prefetch = 0 : i64, scratch_operands = 4 : i64, tpu.core_type = #tpu.core_type<tc>, window_params = [{transform_indices = @transform_0, window_bounds = array<i64: 1, 16, 32>}, {transform_indices = @transform_1, window_bounds = array<i64: 1, 16, 32>}, {pipeline_mode = #tpu.pipeline_mode<synchronous>, transform_indices = @transform_2, window_bounds = array<i64: 1, 32>}, {pipeline_mode = #tpu.pipeline_mode<synchronous>, transform_indices = @transform_3, window_bounds = array<i64: 1, 32>}, {pipeline_mode = #tpu.pipeline_mode<synchronous>, transform_indices = @transform_4, window_bounds = array<i64: 32, 32>}, {pipeline_mode = #tpu.pipeline_mode<synchronous>, transform_indices = @transform_5, window_bounds = array<i64: 1, 32>}, {pipeline_mode = #tpu.pipeline_mode<synchronous>, transform_indices = @transform_6, window_bounds = array<i64: 32, 32>}, {pipeline_mode = #tpu.pipeline_mode<synchronous>, transform_indices = @transform_7, window_bounds = array<i64: 1, 32>}, {pipeline_mode = #tpu.pipeline_mode<synchronous>, transform_indices = @transform_8, window_bounds = array<i64: 32, 32>}, {pipeline_mode = #tpu.pipeline_mode<synchronous>, transform_indices = @transform_9, window_bounds = array<i64: 1, 32>}, {pipeline_mode = #tpu.pipeline_mode<synchronous>, transform_indices = @transform_10, window_bounds = array<i64: 32, 32>}, {pipeline_mode = #tpu.pipeline_mode<synchronous>, transform_indices = @transform_11, window_bounds = array<i64: 1, 32>}, {pipeline_mode = #tpu.pipeline_mode<synchronous>, transform_indices = @transform_12, window_bounds = array<i64: 1, 32>}, {pipeline_mode = #tpu.pipeline_mode<synchronous>, transform_indices = @transform_13, window_bounds = array<i64: 1, 32>}, {pipeline_mode = #tpu.pipeline_mode<synchronous>, transform_indices = @transform_14, window_bounds = array<i64: 32, 64>}, {pipeline_mode = #tpu.pipeline_mode<synchronous>, transform_indices = @transform_15, window_bounds = array<i64: 1, 64>}, {pipeline_mode = #tpu.pipeline_mode<synchronous>, transform_indices = @transform_16, window_bounds = array<i64: 64, 32>}, {pipeline_mode = #tpu.pipeline_mode<synchronous>, transform_indices = @transform_17, window_bounds = array<i64: 1, 32>}, {transform_indices = @transform_18, window_bounds = array<i64: 1, 16, 32>}]} {
    %c0 = arith.constant 0 : index
    %c0_0 = arith.constant 0 : index
    %c0_1 = arith.constant 0 : index
    %0 = vector.load %arg2[%c0, %c0_0, %c0_1] : memref<1x16x32xf32, #tpu.memory_space<vmem>>, vector<1x16x32xf32>
    %1 = vector.shape_cast %0 : vector<1x16x32xf32> to vector<16x32xf32>
    %cst = arith.constant dense<0.000000e+00> : vector<16xf32>
    %2 = vector.multi_reduction <add>, %1, %cst [1] : vector<16x32xf32> to vector<16xf32>
    %3 = vector.shape_cast %2 : vector<16xf32> to vector<16x1xf32>
    %cst_2 = arith.constant 3.200000e+01 : f32
    %4 = vector.broadcast %cst_2 : f32 to vector<16x1xf32>
    %5 = arith.divf %3, %4 : vector<16x1xf32>
    %6 = vector.broadcast %5 : vector<16x1xf32> to vector<16x32xf32>
    %7 = arith.subf %1, %6 : vector<16x32xf32>
    %8 = arith.mulf %7, %7 : vector<16x32xf32>
    %cst_3 = arith.constant dense<0.000000e+00> : vector<16xf32>
    %9 = vector.multi_reduction <add>, %8, %cst_3 [1] : vector<16x32xf32> to vector<16xf32>
    %10 = vector.shape_cast %9 : vector<16xf32> to vector<16x1xf32>
    %cst_4 = arith.constant 3.200000e+01 : f32
    %11 = vector.broadcast %cst_4 : f32 to vector<16x1xf32>
    %12 = arith.divf %10, %11 : vector<16x1xf32>
    %cst_5 = arith.constant 9.99999974E-6 : f32
    %13 = vector.broadcast %cst_5 : f32 to vector<16x1xf32>
    %14 = arith.addf %12, %13 : vector<16x1xf32>
    %15 = math.rsqrt %14 : vector<16x1xf32>
    %16 = vector.broadcast %15 : vector<16x1xf32> to vector<16x32xf32>
    %17 = arith.mulf %7, %16 : vector<16x32xf32>
    %c0_6 = arith.constant 0 : index
    %c0_7 = arith.constant 0 : index
    %18 = vector.load %arg4[%c0_6, %c0_7] : memref<1x32xf32, #tpu.memory_space<vmem>>, vector<1x32xf32>
    %19 = vector.broadcast %18 : vector<1x32xf32> to vector<16x32xf32>
    %20 = arith.mulf %17, %19 : vector<16x32xf32>
    %c0_8 = arith.constant 0 : index
    %c0_9 = arith.constant 0 : index
    %21 = vector.load %arg5[%c0_8, %c0_9] : memref<1x32xf32, #tpu.memory_space<vmem>>, vector<1x32xf32>
    %22 = vector.broadcast %21 : vector<1x32xf32> to vector<16x32xf32>
    %23 = arith.addf %20, %22 : vector<16x32xf32>
    %24 = arith.truncf %23 : vector<16x32xf32> to vector<16x32xbf16>
    %c0_10 = arith.constant 0 : index
    %c0_11 = arith.constant 0 : index
    %25 = vector.load %arg6[%c0_10, %c0_11] : memref<32x32xbf16, #tpu.memory_space<vmem>>, vector<32x32xbf16>
    %cst_12 = arith.constant dense<0.000000e+00> : vector<16x32xf32>
    %26 = tpu.matmul %24, %25, %cst_12 {dimension_numbers = #tpu.dot_dimension_numbers<[1], [0], [0], [1], [0, 0, 1, 1], [], []>} : vector<16x32xbf16>, vector<32x32xbf16>, vector<16x32xf32> -> vector<16x32xf32>
    %c0_13 = arith.constant 0 : index
    %c0_14 = arith.constant 0 : index
    %27 = vector.load %arg7[%c0_13, %c0_14] : memref<1x32xf32, #tpu.memory_space<vmem>>, vector<1x32xf32>
    %28 = vector.broadcast %27 : vector<1x32xf32> to vector<16x32xf32>
    %29 = arith.addf %26, %28 : vector<16x32xf32>
    %30 = arith.truncf %29 : vector<16x32xf32> to vector<16x32xbf16>
    %31 = vector.shape_cast %30 : vector<16x32xbf16> to vector<16x4x8xbf16>
    %32 = tpu.transpose %31, [1, 0, 2] : vector<16x4x8xbf16> -> vector<4x16x8xbf16>
    %c0_15 = arith.constant 0 : index
    %c0_16 = arith.constant 0 : index
    %c0_17 = arith.constant 0 : index
    %33 = vector.load %arg21[%c0_15, %c0_16, %c0_17] : memref<4x16x8xbf16, #tpu.memory_space<vmem>>, vector<4x16x8xbf16>
    tpu.vector_store %arg21[%c0_15, %c0_16, %c0_17], %32 {strides = array<i32>} : memref<4x16x8xbf16, #tpu.memory_space<vmem>>, vector<4x16x8xbf16>,
    %c0_18 = arith.constant 0 : index
    %c0_19 = arith.constant 0 : index
    %34 = vector.load %arg8[%c0_18, %c0_19] : memref<32x32xbf16, #tpu.memory_space<vmem>>, vector<32x32xbf16>
    %cst_20 = arith.constant dense<0.000000e+00> : vector<16x32xf32>
    %35 = tpu.matmul %24, %34, %cst_20 {dimension_numbers = #tpu.dot_dimension_numbers<[1], [0], [0], [1], [0, 0, 1, 1], [], []>} : vector<16x32xbf16>, vector<32x32xbf16>, vector<16x32xf32> -> vector<16x32xf32>
    %c0_21 = arith.constant 0 : index
    %c0_22 = arith.constant 0 : index
    %36 = vector.load %arg9[%c0_21, %c0_22] : memref<1x32xf32, #tpu.memory_space<vmem>>, vector<1x32xf32>
    %37 = vector.broadcast %36 : vector<1x32xf32> to vector<16x32xf32>
    %38 = arith.addf %35, %37 : vector<16x32xf32>
    %39 = arith.truncf %38 : vector<16x32xf32> to vector<16x32xbf16>
    %40 = vector.shape_cast %39 : vector<16x32xbf16> to vector<16x4x8xbf16>
    %41 = tpu.transpose %40, [1, 0, 2] : vector<16x4x8xbf16> -> vector<4x16x8xbf16>
    %c0_23 = arith.constant 0 : index
    %c0_24 = arith.constant 0 : index
    %c0_25 = arith.constant 0 : index
    %42 = vector.load %arg22[%c0_23, %c0_24, %c0_25] : memref<4x16x8xbf16, #tpu.memory_space<vmem>>, vector<4x16x8xbf16>
    tpu.vector_store %arg22[%c0_23, %c0_24, %c0_25], %41 {strides = array<i32>} : memref<4x16x8xbf16, #tpu.memory_space<vmem>>, vector<4x16x8xbf16>,
    %c0_26 = arith.constant 0 : index
    %c0_27 = arith.constant 0 : index
    %43 = vector.load %arg10[%c0_26, %c0_27] : memref<32x32xbf16, #tpu.memory_space<vmem>>, vector<32x32xbf16>
    %cst_28 = arith.constant dense<0.000000e+00> : vector<16x32xf32>
    %44 = tpu.matmul %24, %43, %cst_28 {dimension_numbers = #tpu.dot_dimension_numbers<[1], [0], [0], [1], [0, 0, 1, 1], [], []>} : vector<16x32xbf16>, vector<32x32xbf16>, vector<16x32xf32> -> vector<16x32xf32>
    %c0_29 = arith.constant 0 : index
    %c0_30 = arith.constant 0 : index
    %45 = vector.load %arg11[%c0_29, %c0_30] : memref<1x32xf32, #tpu.memory_space<vmem>>, vector<1x32xf32>
    %46 = vector.broadcast %45 : vector<1x32xf32> to vector<16x32xf32>
    %47 = arith.addf %44, %46 : vector<16x32xf32>
    %48 = arith.truncf %47 : vector<16x32xf32> to vector<16x32xbf16>
    %49 = vector.shape_cast %48 : vector<16x32xbf16> to vector<16x4x8xbf16>
    %50 = tpu.transpose %49, [1, 0, 2] : vector<16x4x8xbf16> -> vector<4x16x8xbf16>
    %c0_31 = arith.constant 0 : index
    %c0_32 = arith.constant 0 : index
    %c0_33 = arith.constant 0 : index
    %51 = vector.load %arg23[%c0_31, %c0_32, %c0_33] : memref<4x16x8xbf16, #tpu.memory_space<vmem>>, vector<4x16x8xbf16>
    tpu.vector_store %arg23[%c0_31, %c0_32, %c0_33], %50 {strides = array<i32>} : memref<4x16x8xbf16, #tpu.memory_space<vmem>>, vector<4x16x8xbf16>,
    %c0_i32 = arith.constant 0 : i32
    %c4_i32 = arith.constant 4 : i32
    %52 = arith.addi %c0_i32, %c4_i32 : i32
    %c1_i32 = arith.constant 1 : i32
    scf.for %arg25 = %c0_i32 to %52 step %c1_i32  : i32 {
      %c1_i32_66 = arith.constant 1 : i32
      %106 = arith.muli %arg25, %c1_i32_66 : i32
      %c0_i32_67 = arith.constant 0 : i32
      %107 = arith.addi %c0_i32_67, %106 : i32
      %108 = arith.index_cast %107 : i32 to index
      %c0_68 = arith.constant 0 : index
      %c0_69 = arith.constant 0 : index
      %109 = vector.load %arg21[%108, %c0_68, %c0_69] : memref<4x16x8xbf16, #tpu.memory_space<vmem>>, vector<1x16x8xbf16>
      %110 = vector.shape_cast %109 : vector<1x16x8xbf16> to vector<16x8xbf16>
      %111 = arith.index_cast %107 : i32 to index
      %c0_70 = arith.constant 0 : index
      %c0_71 = arith.constant 0 : index
      %112 = vector.load %arg22[%111, %c0_70, %c0_71] : memref<4x16x8xbf16, #tpu.memory_space<vmem>>, vector<1x16x8xbf16>
      %113 = vector.shape_cast %112 : vector<1x16x8xbf16> to vector<16x8xbf16>
      %114 = arith.index_cast %107 : i32 to index
      %c0_72 = arith.constant 0 : index
      %c0_73 = arith.constant 0 : index
      %115 = vector.load %arg23[%114, %c0_72, %c0_73] : memref<4x16x8xbf16, #tpu.memory_space<vmem>>, vector<1x16x8xbf16>
      %116 = vector.shape_cast %115 : vector<1x16x8xbf16> to vector<16x8xbf16>
      %cst_74 = arith.constant dense<0.000000e+00> : vector<16x16xf32>
      %117 = tpu.matmul %110, %113, %cst_74 {dimension_numbers = #tpu.dot_dimension_numbers<[1], [1], [0], [0], [0, 0, 1, 0], [], []>} : vector<16x8xbf16>, vector<16x8xbf16>, vector<16x16xf32> -> vector<16x16xf32>
      %cst_75 = arith.constant dense<0xFF800000> : vector<16xf32>
      %118 = vector.multi_reduction <maximumf>, %117, %cst_75 [1] : vector<16x16xf32> to vector<16xf32>
      %119 = vector.shape_cast %118 : vector<16xf32> to vector<16x1xf32>
      %120 = vector.broadcast %119 : vector<16x1xf32> to vector<16x16xf32>
      %121 = arith.subf %117, %120 : vector<16x16xf32>
      %122 = math.exp %121 : vector<16x16xf32>
      %cst_76 = arith.constant dense<0.000000e+00> : vector<16xf32>
      %123 = vector.multi_reduction <add>, %122, %cst_76 [1] : vector<16x16xf32> to vector<16xf32>
      %124 = vector.shape_cast %123 : vector<16xf32> to vector<16x1xf32>
      %125 = tpu.reciprocal %124 {approx = true} : vector<16x1xf32> -> vector<16x1xf32>
      %126 = vector.broadcast %125 : vector<16x1xf32> to vector<16x16xf32>
      %127 = arith.mulf %122, %126 : vector<16x16xf32>
      %128 = arith.truncf %127 : vector<16x16xf32> to vector<16x16xbf16>
      %cst_77 = arith.constant dense<0.000000e+00> : vector<16x8xf32>
      %129 = tpu.matmul %128, %116, %cst_77 {dimension_numbers = #tpu.dot_dimension_numbers<[1], [0], [0], [1], [0, 0, 1, 1], [], []>} : vector<16x16xbf16>, vector<16x8xbf16>, vector<16x8xf32> -> vector<16x8xf32>
      %130 = arith.truncf %129 : vector<16x8xf32> to vector<16x8xbf16>
      %131 = arith.index_cast %107 : i32 to index
      %c0_78 = arith.constant 0 : index
      %c0_79 = arith.constant 0 : index
      %132 = vector.load %arg24[%131, %c0_78, %c0_79] : memref<4x16x8xbf16, #tpu.memory_space<vmem>>, vector<1x16x8xbf16>
      %133 = vector.shape_cast %132 : vector<1x16x8xbf16> to vector<16x8xbf16>
      %134 = vector.shape_cast %130 : vector<16x8xbf16> to vector<1x16x8xbf16>
      tpu.vector_store %arg24[%131, %c0_78, %c0_79], %134 {strides = array<i32>} : memref<4x16x8xbf16, #tpu.memory_space<vmem>>, vector<1x16x8xbf16>,
    }
    %c4_i32_34 = arith.constant 4 : i32
    %c0_35 = arith.constant 0 : index
    %c0_36 = arith.constant 0 : index
    %c0_37 = arith.constant 0 : index
    %53 = vector.load %arg24[%c0_35, %c0_36, %c0_37] : memref<4x16x8xbf16, #tpu.memory_space<vmem>>, vector<4x16x8xbf16>
    %54 = tpu.transpose %53, [1, 0, 2] : vector<4x16x8xbf16> -> vector<16x4x8xbf16>
    %55 = vector.shape_cast %54 : vector<16x4x8xbf16> to vector<16x32xbf16>
    %c0_38 = arith.constant 0 : index
    %c0_39 = arith.constant 0 : index
    %56 = vector.load %arg12[%c0_38, %c0_39] : memref<32x32xbf16, #tpu.memory_space<vmem>>, vector<32x32xbf16>
    %cst_40 = arith.constant dense<0.000000e+00> : vector<16x32xf32>
    %57 = tpu.matmul %55, %56, %cst_40 {dimension_numbers = #tpu.dot_dimension_numbers<[1], [0], [0], [1], [0, 0, 1, 1], [], []>} : vector<16x32xbf16>, vector<32x32xbf16>, vector<16x32xf32> -> vector<16x32xf32>
    %c0_41 = arith.constant 0 : index
    %c0_42 = arith.constant 0 : index
    %58 = vector.load %arg13[%c0_41, %c0_42] : memref<1x32xf32, #tpu.memory_space<vmem>>, vector<1x32xf32>
    %59 = vector.broadcast %58 : vector<1x32xf32> to vector<16x32xf32>
    %60 = arith.addf %57, %59 : vector<16x32xf32>
    %61 = arith.addf %1, %60 : vector<16x32xf32>
    %cst_43 = arith.constant dense<0.000000e+00> : vector<16xf32>
    %62 = vector.multi_reduction <add>, %61, %cst_43 [1] : vector<16x32xf32> to vector<16xf32>
    %63 = vector.shape_cast %62 : vector<16xf32> to vector<16x1xf32>
    %cst_44 = arith.constant 3.200000e+01 : f32
    %64 = vector.broadcast %cst_44 : f32 to vector<16x1xf32>
    %65 = arith.divf %63, %64 : vector<16x1xf32>
    %66 = vector.broadcast %65 : vector<16x1xf32> to vector<16x32xf32>
    %67 = arith.subf %61, %66 : vector<16x32xf32>
    %68 = arith.mulf %67, %67 : vector<16x32xf32>
    %cst_45 = arith.constant dense<0.000000e+00> : vector<16xf32>
    %69 = vector.multi_reduction <add>, %68, %cst_45 [1] : vector<16x32xf32> to vector<16xf32>
    %70 = vector.shape_cast %69 : vector<16xf32> to vector<16x1xf32>
    %cst_46 = arith.constant 3.200000e+01 : f32
    %71 = vector.broadcast %cst_46 : f32 to vector<16x1xf32>
    %72 = arith.divf %70, %71 : vector<16x1xf32>
    %cst_47 = arith.constant 9.99999974E-6 : f32
    %73 = vector.broadcast %cst_47 : f32 to vector<16x1xf32>
    %74 = arith.addf %72, %73 : vector<16x1xf32>
    %75 = math.rsqrt %74 : vector<16x1xf32>
    %76 = vector.broadcast %75 : vector<16x1xf32> to vector<16x32xf32>
    %77 = arith.mulf %67, %76 : vector<16x32xf32>
    %c0_48 = arith.constant 0 : index
    %c0_49 = arith.constant 0 : index
    %78 = vector.load %arg14[%c0_48, %c0_49] : memref<1x32xf32, #tpu.memory_space<vmem>>, vector<1x32xf32>
    %79 = vector.broadcast %78 : vector<1x32xf32> to vector<16x32xf32>
    %80 = arith.mulf %77, %79 : vector<16x32xf32>
    %c0_50 = arith.constant 0 : index
    %c0_51 = arith.constant 0 : index
    %81 = vector.load %arg15[%c0_50, %c0_51] : memref<1x32xf32, #tpu.memory_space<vmem>>, vector<1x32xf32>
    %82 = vector.broadcast %81 : vector<1x32xf32> to vector<16x32xf32>
    %83 = arith.addf %80, %82 : vector<16x32xf32>
    %84 = arith.truncf %83 : vector<16x32xf32> to vector<16x32xbf16>
    %c0_52 = arith.constant 0 : index
    %c0_53 = arith.constant 0 : index
    %85 = vector.load %arg16[%c0_52, %c0_53] : memref<32x64xbf16, #tpu.memory_space<vmem>>, vector<32x64xbf16>
    %cst_54 = arith.constant dense<0.000000e+00> : vector<16x64xf32>
    %86 = tpu.matmul %84, %85, %cst_54 {dimension_numbers = #tpu.dot_dimension_numbers<[1], [0], [0], [1], [0, 0, 1, 1], [], []>} : vector<16x32xbf16>, vector<32x64xbf16>, vector<16x64xf32> -> vector<16x64xf32>
    %c0_55 = arith.constant 0 : index
    %c0_56 = arith.constant 0 : index
    %87 = vector.load %arg17[%c0_55, %c0_56] : memref<1x64xf32, #tpu.memory_space<vmem>>, vector<1x64xf32>
    %88 = vector.broadcast %87 : vector<1x64xf32> to vector<16x64xf32>
    %89 = arith.addf %86, %88 : vector<16x64xf32>
    %90 = arith.negf %89 : vector<16x64xf32>
    %91 = math.exp %90 : vector<16x64xf32>
    %cst_57 = arith.constant 1.000000e+00 : f32
    %92 = vector.broadcast %cst_57 : f32 to vector<16x64xf32>
    %93 = arith.addf %92, %91 : vector<16x64xf32>
    %94 = arith.divf %92, %93 : vector<16x64xf32>
    %95 = arith.mulf %89, %94 : vector<16x64xf32>
    %96 = arith.truncf %95 : vector<16x64xf32> to vector<16x64xbf16>
    %c0_58 = arith.constant 0 : index
    %c0_59 = arith.constant 0 : index
    %97 = vector.load %arg18[%c0_58, %c0_59] : memref<64x32xbf16, #tpu.memory_space<vmem>>, vector<64x32xbf16>
    %cst_60 = arith.constant dense<0.000000e+00> : vector<16x32xf32>
    %98 = tpu.matmul %96, %97, %cst_60 {dimension_numbers = #tpu.dot_dimension_numbers<[1], [0], [0], [1], [0, 0, 1, 1], [], []>} : vector<16x64xbf16>, vector<64x32xbf16>, vector<16x32xf32> -> vector<16x32xf32>
    %c0_61 = arith.constant 0 : index
    %c0_62 = arith.constant 0 : index
    %99 = vector.load %arg19[%c0_61, %c0_62] : memref<1x32xf32, #tpu.memory_space<vmem>>, vector<1x32xf32>
    %100 = vector.broadcast %99 : vector<1x32xf32> to vector<16x32xf32>
    %101 = arith.addf %98, %100 : vector<16x32xf32>
    %102 = arith.addf %61, %101 : vector<16x32xf32>
    %c0_63 = arith.constant 0 : index
    %c0_64 = arith.constant 0 : index
    %c0_65 = arith.constant 0 : index
    %103 = vector.load %arg20[%c0_63, %c0_64, %c0_65] : memref<1x16x32xf32, #tpu.memory_space<vmem>>, vector<1x16x32xf32>
    %104 = vector.shape_cast %103 : vector<1x16x32xf32> to vector<16x32xf32>
    %105 = vector.shape_cast %102 : vector<16x32xf32> to vector<1x16x32xf32>
    tpu.vector_store %arg20[%c0_63, %c0_64, %c0_65], %105 {strides = array<i32>} : memref<1x16x32xf32, #tpu.memory_space<vmem>>, vector<1x16x32xf32>,
    return
  }
  func.func @transform_0(%arg0: i32, %arg1: i32) -> (i32, i32, i32) {
    %c0_i32 = arith.constant 0 : i32
    %c0_i32_0 = arith.constant 0 : i32
    %c0_i32_1 = arith.constant 0 : i32
    return %arg0, %c0_i32, %c0_i32_0 : i32, i32, i32
  }
  func.func @transform_1(%arg0: i32, %arg1: i32) -> (i32, i32, i32) {
    %c0_i32 = arith.constant 0 : i32
    %c0_i32_0 = arith.constant 0 : i32
    return %arg0, %arg1, %c0_i32 : i32, i32, i32
  }
  func.func @transform_2(%arg0: i32, %arg1: i32) -> (i32, i32) {
    %c0_i32 = arith.constant 0 : i32
    %c0_i32_0 = arith.constant 0 : i32
    %c0_i32_1 = arith.constant 0 : i32
    return %c0_i32, %c0_i32_0 : i32, i32
  }
  func.func @transform_3(%arg0: i32, %arg1: i32) -> (i32, i32) {
    %c0_i32 = arith.constant 0 : i32
    %c0_i32_0 = arith.constant 0 : i32
    %c0_i32_1 = arith.constant 0 : i32
    return %c0_i32, %c0_i32_0 : i32, i32
  }
  func.func @transform_4(%arg0: i32, %arg1: i32) -> (i32, i32) {
    %c0_i32 = arith.constant 0 : i32
    %c0_i32_0 = arith.constant 0 : i32
    %c0_i32_1 = arith.constant 0 : i32
    return %c0_i32, %c0_i32_0 : i32, i32
  }
  func.func @transform_5(%arg0: i32, %arg1: i32) -> (i32, i32) {
    %c0_i32 = arith.constant 0 : i32
    %c0_i32_0 = arith.constant 0 : i32
    %c0_i32_1 = arith.constant 0 : i32
    return %c0_i32, %c0_i32_0 : i32, i32
  }
  func.func @transform_6(%arg0: i32, %arg1: i32) -> (i32, i32) {
    %c0_i32 = arith.constant 0 : i32
    %c0_i32_0 = arith.constant 0 : i32
    %c0_i32_1 = arith.constant 0 : i32
    return %c0_i32, %c0_i32_0 : i32, i32
  }
  func.func @transform_7(%arg0: i32, %arg1: i32) -> (i32, i32) {
    %c0_i32 = arith.constant 0 : i32
    %c0_i32_0 = arith.constant 0 : i32
    %c0_i32_1 = arith.constant 0 : i32
    return %c0_i32, %c0_i32_0 : i32, i32
  }
  func.func @transform_8(%arg0: i32, %arg1: i32) -> (i32, i32) {
    %c0_i32 = arith.constant 0 : i32
    %c0_i32_0 = arith.constant 0 : i32
    %c0_i32_1 = arith.constant 0 : i32
    return %c0_i32, %c0_i32_0 : i32, i32
  }
  func.func @transform_9(%arg0: i32, %arg1: i32) -> (i32, i32) {
    %c0_i32 = arith.constant 0 : i32
    %c0_i32_0 = arith.constant 0 : i32
    %c0_i32_1 = arith.constant 0 : i32
    return %c0_i32, %c0_i32_0 : i32, i32
  }
  func.func @transform_10(%arg0: i32, %arg1: i32) -> (i32, i32) {
    %c0_i32 = arith.constant 0 : i32
    %c0_i32_0 = arith.constant 0 : i32
    %c0_i32_1 = arith.constant 0 : i32
    return %c0_i32, %c0_i32_0 : i32, i32
  }
  func.func @transform_11(%arg0: i32, %arg1: i32) -> (i32, i32) {
    %c0_i32 = arith.constant 0 : i32
    %c0_i32_0 = arith.constant 0 : i32
    %c0_i32_1 = arith.constant 0 : i32
    return %c0_i32, %c0_i32_0 : i32, i32
  }
  func.func @transform_12(%arg0: i32, %arg1: i32) -> (i32, i32) {
    %c0_i32 = arith.constant 0 : i32
    %c0_i32_0 = arith.constant 0 : i32
    %c0_i32_1 = arith.constant 0 : i32
    return %c0_i32, %c0_i32_0 : i32, i32
  }
  func.func @transform_13(%arg0: i32, %arg1: i32) -> (i32, i32) {
    %c0_i32 = arith.constant 0 : i32
    %c0_i32_0 = arith.constant 0 : i32
    %c0_i32_1 = arith.constant 0 : i32
    return %c0_i32, %c0_i32_0 : i32, i32
  }
  func.func @transform_14(%arg0: i32, %arg1: i32) -> (i32, i32) {
    %c0_i32 = arith.constant 0 : i32
    %c0_i32_0 = arith.constant 0 : i32
    %c0_i32_1 = arith.constant 0 : i32
    return %c0_i32, %c0_i32_0 : i32, i32
  }
  func.func @transform_15(%arg0: i32, %arg1: i32) -> (i32, i32) {
    %c0_i32 = arith.constant 0 : i32
    %c0_i32_0 = arith.constant 0 : i32
    %c0_i32_1 = arith.constant 0 : i32
    return %c0_i32, %c0_i32_0 : i32, i32
  }
  func.func @transform_16(%arg0: i32, %arg1: i32) -> (i32, i32) {
    %c0_i32 = arith.constant 0 : i32
    %c0_i32_0 = arith.constant 0 : i32
    %c0_i32_1 = arith.constant 0 : i32
    return %c0_i32, %c0_i32_0 : i32, i32
  }
  func.func @transform_17(%arg0: i32, %arg1: i32) -> (i32, i32) {
    %c0_i32 = arith.constant 0 : i32
    %c0_i32_0 = arith.constant 0 : i32
    %c0_i32_1 = arith.constant 0 : i32
    return %c0_i32, %c0_i32_0 : i32, i32
  }
  func.func @transform_18(%arg0: i32, %arg1: i32) -> (i32, i32, i32) {
    %c0_i32 = arith.constant 0 : i32
    %c0_i32_0 = arith.constant 0 : i32
    return %arg0, %arg1, %c0_i32 : i32, i32, i32
  }
}

</mosaic_0001>

<llo_original>
// kernel: transformer_encoder.1
$region0: #{transformer_encoder.1}
  #allocation0 [shape = 'u32[]', space=smem, size = 0x4, offset = 0x4, fixed_abs, tag = 'smem constant byte address 0x4 - core index']
  #allocation1 [shape = 'u32[72,128]{1,0:T(1,128)}', space=vmem, size = 0x9000, scoped, tag = 'internal scratch']
  #allocation2 [shape = 'bf16[4,16,8]{2,1,0:T(8,128)(2,1)}', space=vmem, size = 0x4000, scoped, tag = 'scratch operand']
  #allocation3 [shape = 'bf16[4,16,8]{2,1,0:T(8,128)(2,1)}', space=vmem, size = 0x4000, scoped, tag = 'scratch operand']
  #allocation4 [shape = 'bf16[4,16,8]{2,1,0:T(8,128)(2,1)}', space=vmem, size = 0x4000, scoped, tag = 'scratch operand']
  #allocation5 [shape = 'bf16[4,16,8]{2,1,0:T(8,128)(2,1)}', space=vmem, size = 0x4000, scoped, tag = 'scratch operand']
  %s0 = inlined_call_operand.vmem [shape: f32[2,16,32], index: 0, kind: input, shape index: {}, may-alias: {0,1}]
  %s1 = inlined_call_operand.vmem [shape: f32[2,16,32], index: 1, kind: input, shape index: {}, may-alias: {0,1}]
  %s2 = inlined_call_operand.vmem [shape: f32[1,32], index: 2, kind: input, shape index: {}]
  %s3 = inlined_call_operand.vmem [shape: f32[1,32], index: 3, kind: input, shape index: {}]
  %s4 = inlined_call_operand.vmem [shape: bf16[32,32], index: 4, kind: input, shape index: {}]
  %s5 = inlined_call_operand.vmem [shape: f32[1,32], index: 5, kind: input, shape index: {}]
  %s6 = inlined_call_operand.hbm [shape: bf16[32,32], index: 6, kind: input, shape index: {}]
  %s7 = inlined_call_operand.hbm [shape: f32[1,32], index: 7, kind: input, shape index: {}]
  %s8 = inlined_call_operand.hbm [shape: bf16[32,32], index: 8, kind: input, shape index: {}]
  %s9 = inlined_call_operand.vmem [shape: f32[1,32], index: 9, kind: input, shape index: {}]
  %s10 = inlined_call_operand.hbm [shape: bf16[32,32], index: 10, kind: input, shape index: {}]
  %s11 = inlined_call_operand.hbm [shape: f32[1,32], index: 11, kind: input, shape index: {}]
  %s12 = inlined_call_operand.vmem [shape: f32[1,32], index: 12, kind: input, shape index: {}]
  %s13 = inlined_call_operand.vmem [shape: f32[1,32], index: 13, kind: input, shape index: {}]
  %s14 = inlined_call_operand.hbm [shape: bf16[32,64], index: 14, kind: input, shape index: {}]
  %s15 = inlined_call_operand.hbm [shape: f32[1,64], index: 15, kind: input, shape index: {}]
  %s16 = inlined_call_operand.vmem [shape: bf16[64,32], index: 16, kind: input, shape index: {}]
  %s17 = inlined_call_operand.hbm [shape: f32[1,32], index: 17, kind: input, shape index: {}]
  %s18 = inlined_call_operand.hbm [shape: f32[2,16,32], index: 18, kind: output, shape index: {}]
  %s19 = sld [smem:[#allocation0]]
  $region144: #{transformer_encoder.1} parent=0
    _
  %s21 = ssub.s32 1, %s19
  %s22 = scalar_select 0, %s21, %s19
  $region1: #{transformer_encoder.1} parent=0
    #allocation6 [shape = 'u8[8192]{0}', space=vmem, size = 0x2000, scoped, tag = 'input window, operand 6, single buffered']
    #allocation7 [shape = 's32[2]{0}', space=sflag, size = 0x8, scoped, tag = 'scoped memory for transformer_encoder.1']
    #allocation8 [shape = 's32[2]{0}', space=sflag, size = 0x8, scoped, tag = 'scoped memory for transformer_encoder.1']
    #allocation9 [shape = 'u8[512]{0}', space=vmem, size = 0x400, scoped, tag = 'input window, operand 7, single buffered']
    #allocation10 [shape = 's32[1]{0}', space=sflag, size = 0x4, scoped, tag = 'scoped memory for transformer_encoder.1']
    #allocation11 [shape = 'u8[8192]{0}', space=vmem, size = 0x2000, scoped, tag = 'input window, operand 8, single buffered']
    #allocation12 [shape = 'u8[8192]{0}', space=vmem, size = 0x2000, scoped, tag = 'input window, operand 10, single buffered']
    #allocation13 [shape = 's32[1]{0}', space=sflag, size = 0x4, scoped, tag = 'scoped memory for transformer_encoder.1']
    #allocation14 [shape = 'u8[512]{0}', space=vmem, size = 0x400, scoped, tag = 'input window, operand 11, single buffered']
    #allocation15 [shape = 'u8[8192]{0}', space=vmem, size = 0x2000, scoped, tag = 'input window, operand 14, single buffered']
    #allocation16 [shape = 's32[1]{0}', space=sflag, size = 0x4, scoped, tag = 'scoped memory for transformer_encoder.1']
    #allocation17 [shape = 'u8[512]{0}', space=vmem, size = 0x400, scoped, tag = 'input window, operand 15, single buffered']
    #allocation18 [shape = 'u8[512]{0}', space=vmem, size = 0x400, scoped, tag = 'input window, operand 17, single buffered']
    #allocation19 [shape = 's32[1]{0}', space=sflag, size = 0x4, scoped, tag = 'scoped memory for transformer_encoder.1']
    #allocation20 [shape = 'u8[16384]{0}', space=vmem, size = 0x4000, scoped, tag = 'output window, operand 0']
    %23 = vsyncpa [#allocation7], 0
    %24 = vsyncpa [#allocation10], 0
    %25 = vsyncpa [#allocation13], 0
    %26 = vsyncpa [#allocation16], 0
    %27 = vsyncpa [#allocation19], 0
    %28 = vsyncpa [#allocation8], 0
    %s29 = scalar_lea.sflag [#allocation8], 1
    %30 = vsyncpa %s29, 0
    loop: start=0, step=1, limit=4
    $region2: #{transformer_encoder.1} parent=1 // loop_pre_header
      _
    $region3: #{transformer_encoder.1} parent=1 // loop_header
      %s32 = sphi 0, %s36
      %p33 = scmp.ge.s32.totalorder %s32, 4
      %s39 = sphi 0, %s51
      %s40 = sphi 0, %s47
      %s41 = sphi 0, %s39
      %s42 = sphi 0, %s40
      %s43 = sphi 0, %s41
      %s44 = sphi 0, %s42
      %s54 = sphi 0, %s56
      %s57 = sphi 0, %s54
      %s58 = sphi 0, %s57
      %s74 = sphi 0, %s58
      %s82 = sphi 0, %s84
      %s85 = sphi 0, %s82
      %s86 = sphi 0, %s85
      %s102 = sphi 0, %s86
      %s106 = sphi 0, %s106
      %s108 = sphi 0, %s106
      %s109 = sphi 0, %s108
      %s123 = sphi 0, %s109
      %s127 = sphi 0, %s127
      %s129 = sphi 0, %s127
      %s130 = sphi 0, %s129
      %s144 = sphi 0, %s130
      %s148 = sphi 0, %s148
      %s150 = sphi 0, %s148
      %s151 = sphi 0, %s150
      %s165 = sphi 0, %s151
      %s169 = sphi 0, %s169
      %s171 = sphi 0, %s169
      %s172 = sphi 0, %s171
      %s186 = sphi 0, %s172
      %s190 = sphi 0, %s190
      %s192 = sphi 0, %s190
      %s193 = sphi 0, %s192
      %s207 = sphi 0, %s193
      %s211 = sphi 0, %s211
      %s213 = sphi 0, %s211
      %s214 = sphi 0, %s213
      %s228 = sphi 0, %s214
      %s232 = sphi 0, %s232
      %s234 = sphi 0, %s232
      %s235 = sphi 0, %s234
      %s249 = sphi 0, %s235
      %s253 = sphi 0, %s253
      %s255 = sphi 0, %s253
      %s256 = sphi 0, %s255
      %s270 = sphi 0, %s256
      %s274 = sphi 0, %s274
      %s276 = sphi 0, %s274
      %s277 = sphi 0, %s276
      %s291 = sphi 0, %s277
      %s295 = sphi 0, %s295
      %s297 = sphi 0, %s295
      %s298 = sphi 0, %s297
      %s312 = sphi 0, %s298
      %s316 = sphi 0, %s316
      %s318 = sphi 0, %s316
      %s319 = sphi 0, %s318
      %s333 = sphi 0, %s319
      %s337 = sphi 0, %s337
      %s339 = sphi 0, %s337
      %s340 = sphi 0, %s339
      %s354 = sphi 0, %s340
      %s358 = sphi 0, %s358
      %s360 = sphi 0, %s358
      %s361 = sphi 0, %s360
      %s375 = sphi 0, %s361
      %s379 = sphi 0, %s379
      %s381 = sphi 0, %s379
      %s382 = sphi 0, %s381
      %s396 = sphi 0, %s382
      %s400 = sphi 0, %s400
      %s402 = sphi 0, %s400
      %s403 = sphi 0, %s402
      %s417 = sphi 0, %s403
      %s421 = sphi 0, %s421
      %s423 = sphi 0, %s421
      %s424 = sphi 0, %s423
      %s438 = sphi 0, %s424
      %s446 = sphi 0, %s448
      %s449 = sphi 0, %s446
      %s450 = sphi 0, %s449
      %s466 = sphi 0, %s450
    $region4: #{transformer_encoder.1} parent=1 // loop_header_branch
      %35 = sbr.rel (%p33) target = $region8
    $region5: #{transformer_encoder.1} parent=1 // loop_body
      %s37 = ssub.s32 %s32, 1
      %s38 = ssub.s32 %s32, 2
      %s45 = sadd.s32 1, %s40
      %p46 = scmp.ge.s32.totalorder %s45, 1
      %s47 = scalar_select %p46, 0, %s45
      %s48 = sadd.s32 1, %s39
      %s49 = scalar_select %p46, %s48, %s39
      %p50 = scmp.ge.s32.totalorder %s49, 2
      %s51 = scalar_select %p50, 0, %s49
      %s52 = ssub.s32 %s39, %s51
      %p53 = scmp.eq.s32.totalorder %s52, 0
      %s55 = sadd.s32 %s54, 1
      %s56 = scalar_select %p53, %s54, %s55
      %p59 = pneg %p53
      %p60 = scmp.eq.s32.totalorder %s32, 1
      %p61 = por %p59, %p60
      %p62 = scmp.ne.s32.totalorder %s54, %s57
      %p63 = scmp.eq.s32.totalorder %s32, 0
      %p64 = por %p62, %p63
      %p65 = scmp.ne.s32.totalorder %s54, %s57
      %p66 = scmp.eq.s32.totalorder %s37, 1
      %p67 = por %p65, %p66
      %p68 = scmp.ne.s32.totalorder %s57, %s58
      %p69 = scmp.eq.s32.totalorder %s37, 0
      %p70 = por %p68, %p69
      %p71 = scmp.ne.s32.totalorder %s57, %s58
      %p72 = scmp.eq.s32.totalorder %s38, 1
      %p73 = por %p71, %p72
      %p75 = scmp.ne.s32.totalorder %s58, %s74
      %p76 = scmp.eq.s32.totalorder %s38, 0
      %p77 = por %p75, %p76
      %s78 = ssub.s32 %s39, %s51
      %s79 = ssub.s32 %s40, %s47
      %s80 = sor.u32 %s78, %s79
      %p81 = scmp.eq.s32.totalorder %s80, 0
      %s83 = sadd.s32 %s82, 1
      %s84 = scalar_select %p81, %s82, %s83
      %p87 = pneg %p81
      %p88 = scmp.eq.s32.totalorder %s32, 1
      %p89 = por %p87, %p88
      %p90 = scmp.ne.s32.totalorder %s82, %s85
      %p91 = scmp.eq.s32.totalorder %s32, 0
      %p92 = por %p90, %p91
      %p93 = scmp.ne.s32.totalorder %s82, %s85
      %p94 = scmp.eq.s32.totalorder %s37, 1
      %p95 = por %p93, %p94
      %p96 = scmp.ne.s32.totalorder %s85, %s86
      %p97 = scmp.eq.s32.totalorder %s37, 0
      %p98 = por %p96, %p97
      %p99 = scmp.ne.s32.totalorder %s85, %s86
      %p100 = scmp.eq.s32.totalorder %s38, 1
      %p101 = por %p99, %p100
      %p103 = scmp.ne.s32.totalorder %s86, %s102
      %p104 = scmp.eq.s32.totalorder %s38, 0
      %p105 = por %p103, %p104
      %s107 = sadd.s32 %s106, 1
      %p110 = scmp.eq.s32.totalorder %s32, 1
      %p111 = scmp.ne.s32.totalorder %s106, %s108
      %p112 = scmp.eq.s32.totalorder %s32, 0
      %p113 = por %p111, %p112
      %p114 = scmp.ne.s32.totalorder %s106, %s108
      %p115 = scmp.eq.s32.totalorder %s37, 1
      %p116 = por %p114, %p115
      %p117 = scmp.ne.s32.totalorder %s108, %s109
      %p118 = scmp.eq.s32.totalorder %s37, 0
      %p119 = por %p117, %p118
      %p120 = scmp.ne.s32.totalorder %s108, %s109
      %p121 = scmp.eq.s32.totalorder %s38, 1
      %p122 = por %p120, %p121
      %p124 = scmp.ne.s32.totalorder %s109, %s123
      %p125 = scmp.eq.s32.totalorder %s38, 0
      %p126 = por %p124, %p125
      %s128 = sadd.s32 %s127, 1
      %p131 = scmp.eq.s32.totalorder %s32, 1
      %p132 = scmp.ne.s32.totalorder %s127, %s129
      %p133 = scmp.eq.s32.totalorder %s32, 0
      %p134 = por %p132, %p133
      %p135 = scmp.ne.s32.totalorder %s127, %s129
      %p136 = scmp.eq.s32.totalorder %s37, 1
      %p137 = por %p135, %p136
      %p138 = scmp.ne.s32.totalorder %s129, %s130
      %p139 = scmp.eq.s32.totalorder %s37, 0
      %p140 = por %p138, %p139
      %p141 = scmp.ne.s32.totalorder %s129, %s130
      %p142 = scmp.eq.s32.totalorder %s38, 1
      %p143 = por %p141, %p142
      %p145 = scmp.ne.s32.totalorder %s130, %s144
      %p146 = scmp.eq.s32.totalorder %s38, 0
      %p147 = por %p145, %p146
      %s149 = sadd.s32 %s148, 1
      %p152 = scmp.eq.s32.totalorder %s32, 1
      %p153 = scmp.ne.s32.totalorder %s148, %s150
      %p154 = scmp.eq.s32.totalorder %s32, 0
      %p155 = por %p153, %p154
      %p156 = scmp.ne.s32.totalorder %s148, %s150
      %p157 = scmp.eq.s32.totalorder %s37, 1
      %p158 = por %p156, %p157
      %p159 = scmp.ne.s32.totalorder %s150, %s151
      %p160 = scmp.eq.s32.totalorder %s37, 0
      %p161 = por %p159, %p160
      %p162 = scmp.ne.s32.totalorder %s150, %s151
      %p163 = scmp.eq.s32.totalorder %s38, 1
      %p164 = por %p162, %p163
      %p166 = scmp.ne.s32.totalorder %s151, %s165
      %p167 = scmp.eq.s32.totalorder %s38, 0
      %p168 = por %p166, %p167
      %s170 = sadd.s32 %s169, 1
      %p173 = scmp.eq.s32.totalorder %s32, 1
      %p174 = scmp.ne.s32.totalorder %s169, %s171
      %p175 = scmp.eq.s32.totalorder %s32, 0
      %p176 = por %p174, %p175
      %p177 = scmp.ne.s32.totalorder %s169, %s171
      %p178 = scmp.eq.s32.totalorder %s37, 1
      %p179 = por %p177, %p178
      %p180 = scmp.ne.s32.totalorder %s171, %s172
      %p181 = scmp.eq.s32.totalorder %s37, 0
      %p182 = por %p180, %p181
      %p183 = scmp.ne.s32.totalorder %s171, %s172
      %p184 = scmp.eq.s32.totalorder %s38, 1
      %p185 = por %p183, %p184
      %p187 = scmp.ne.s32.totalorder %s172, %s186
      %p188 = scmp.eq.s32.totalorder %s38, 0
      %p189 = por %p187, %p188
      %s191 = sadd.s32 %s190, 1
      %p194 = scmp.eq.s32.totalorder %s32, 1
      %p195 = scmp.ne.s32.totalorder %s190, %s192
      %p196 = scmp.eq.s32.totalorder %s32, 0
      %p197 = por %p195, %p196
      %p198 = scmp.ne.s32.totalorder %s190, %s192
      %p199 = scmp.eq.s32.totalorder %s37, 1
      %p200 = por %p198, %p199
      %p201 = scmp.ne.s32.totalorder %s192, %s193
      %p202 = scmp.eq.s32.totalorder %s37, 0
      %p203 = por %p201, %p202
      %p204 = scmp.ne.s32.totalorder %s192, %s193
      %p205 = scmp.eq.s32.totalorder %s38, 1
      %p206 = por %p204, %p205
      %p208 = scmp.ne.s32.totalorder %s193, %s207
      %p209 = scmp.eq.s32.totalorder %s38, 0
      %p210 = por %p208, %p209
      %s212 = sadd.s32 %s211, 1
      %p215 = scmp.eq.s32.totalorder %s32, 1
      %p216 = scmp.ne.s32.totalorder %s211, %s213
      %p217 = scmp.eq.s32.totalorder %s32, 0
      %p218 = por %p216, %p217
      %p219 = scmp.ne.s32.totalorder %s211, %s213
      %p220 = scmp.eq.s32.totalorder %s37, 1
      %p221 = por %p219, %p220
      %p222 = scmp.ne.s32.totalorder %s213, %s214
      %p223 = scmp.eq.s32.totalorder %s37, 0
      %p224 = por %p222, %p223
      %p225 = scmp.ne.s32.totalorder %s213, %s214
      %p226 = scmp.eq.s32.totalorder %s38, 1
      %p227 = por %p225, %p226
      %p229 = scmp.ne.s32.totalorder %s214, %s228
      %p230 = scmp.eq.s32.totalorder %s38, 0
      %p231 = por %p229, %p230
      %s233 = sadd.s32 %s232, 1
      %p236 = scmp.eq.s32.totalorder %s32, 1
      %p237 = scmp.ne.s32.totalorder %s232, %s234
      %p238 = scmp.eq.s32.totalorder %s32, 0
      %p239 = por %p237, %p238
      %p240 = scmp.ne.s32.totalorder %s232, %s234
      %p241 = scmp.eq.s32.totalorder %s37, 1
      %p242 = por %p240, %p241
      %p243 = scmp.ne.s32.totalorder %s234, %s235
      %p244 = scmp.eq.s32.totalorder %s37, 0
      %p245 = por %p243, %p244
      %p246 = scmp.ne.s32.totalorder %s234, %s235
      %p247 = scmp.eq.s32.totalorder %s38, 1
      %p248 = por %p246, %p247
      %p250 = scmp.ne.s32.totalorder %s235, %s249
      %p251 = scmp.eq.s32.totalorder %s38, 0
      %p252 = por %p250, %p251
      %s254 = sadd.s32 %s253, 1
      %p257 = scmp.eq.s32.totalorder %s32, 1
      %p258 = scmp.ne.s32.totalorder %s253, %s255
      %p259 = scmp.eq.s32.totalorder %s32, 0
      %p260 = por %p258, %p259
      %p261 = scmp.ne.s32.totalorder %s253, %s255
      %p262 = scmp.eq.s32.totalorder %s37, 1
      %p263 = por %p261, %p262
      %p264 = scmp.ne.s32.totalorder %s255, %s256
      %p265 = scmp.eq.s32.totalorder %s37, 0
      %p266 = por %p264, %p265
      %p267 = scmp.ne.s32.totalorder %s255, %s256
      %p268 = scmp.eq.s32.totalorder %s38, 1
      %p269 = por %p267, %p268
      %p271 = scmp.ne.s32.totalorder %s256, %s270
      %p272 = scmp.eq.s32.totalorder %s38, 0
      %p273 = por %p271, %p272
      %s275 = sadd.s32 %s274, 1
      %p278 = scmp.eq.s32.totalorder %s32, 1
      %p279 = scmp.ne.s32.totalorder %s274, %s276
      %p280 = scmp.eq.s32.totalorder %s32, 0
      %p281 = por %p279, %p280
      %p282 = scmp.ne.s32.totalorder %s274, %s276
      %p283 = scmp.eq.s32.totalorder %s37, 1
      %p284 = por %p282, %p283
      %p285 = scmp.ne.s32.totalorder %s276, %s277
      %p286 = scmp.eq.s32.totalorder %s37, 0
      %p287 = por %p285, %p286
      %p288 = scmp.ne.s32.totalorder %s276, %s277
      %p289 = scmp.eq.s32.totalorder %s38, 1
      %p290 = por %p288, %p289
      %p292 = scmp.ne.s32.totalorder %s277, %s291
      %p293 = scmp.eq.s32.totalorder %s38, 0
      %p294 = por %p292, %p293
      %s296 = sadd.s32 %s295, 1
      %p299 = scmp.eq.s32.totalorder %s32, 1
      %p300 = scmp.ne.s32.totalorder %s295, %s297
      %p301 = scmp.eq.s32.totalorder %s32, 0
      %p302 = por %p300, %p301
      %p303 = scmp.ne.s32.totalorder %s295, %s297
      %p304 = scmp.eq.s32.totalorder %s37, 1
      %p305 = por %p303, %p304
      %p306 = scmp.ne.s32.totalorder %s297, %s298
      %p307 = scmp.eq.s32.totalorder %s37, 0
      %p308 = por %p306, %p307
      %p309 = scmp.ne.s32.totalorder %s297, %s298
      %p310 = scmp.eq.s32.totalorder %s38, 1
      %p311 = por %p309, %p310
      %p313 = scmp.ne.s32.totalorder %s298, %s312
      %p314 = scmp.eq.s32.totalorder %s38, 0
      %p315 = por %p313, %p314
      %s317 = sadd.s32 %s316, 1
      %p320 = scmp.eq.s32.totalorder %s32, 1
      %p321 = scmp.ne.s32.totalorder %s316, %s318
      %p322 = scmp.eq.s32.totalorder %s32, 0
      %p323 = por %p321, %p322
      %p324 = scmp.ne.s32.totalorder %s316, %s318
      %p325 = scmp.eq.s32.totalorder %s37, 1
      %p326 = por %p324, %p325
      %p327 = scmp.ne.s32.totalorder %s318, %s319
      %p328 = scmp.eq.s32.totalorder %s37, 0
      %p329 = por %p327, %p328
      %p330 = scmp.ne.s32.totalorder %s318, %s319
      %p331 = scmp.eq.s32.totalorder %s38, 1
      %p332 = por %p330, %p331
      %p334 = scmp.ne.s32.totalorder %s319, %s333
      %p335 = scmp.eq.s32.totalorder %s38, 0
      %p336 = por %p334, %p335
      %s338 = sadd.s32 %s337, 1
      %p341 = scmp.eq.s32.totalorder %s32, 1
      %p342 = scmp.ne.s32.totalorder %s337, %s339
      %p343 = scmp.eq.s32.totalorder %s32, 0
      %p344 = por %p342, %p343
      %p345 = scmp.ne.s32.totalorder %s337, %s339
      %p346 = scmp.eq.s32.totalorder %s37, 1
      %p347 = por %p345, %p346
      %p348 = scmp.ne.s32.totalorder %s339, %s340
      %p349 = scmp.eq.s32.totalorder %s37, 0
      %p350 = por %p348, %p349
      %p351 = scmp.ne.s32.totalorder %s339, %s340
      %p352 = scmp.eq.s32.totalorder %s38, 1
      %p353 = por %p351, %p352
      %p355 = scmp.ne.s32.totalorder %s340, %s354
      %p356 = scmp.eq.s32.totalorder %s38, 0
      %p357 = por %p355, %p356
      %s359 = sadd.s32 %s358, 1
      %p362 = scmp.eq.s32.totalorder %s32, 1
      %p363 = scmp.ne.s32.totalorder %s358, %s360
      %p364 = scmp.eq.s32.totalorder %s32, 0
      %p365 = por %p363, %p364
      %p366 = scmp.ne.s32.totalorder %s358, %s360
      %p367 = scmp.eq.s32.totalorder %s37, 1
      %p368 = por %p366, %p367
      %p369 = scmp.ne.s32.totalorder %s360, %s361
      %p370 = scmp.eq.s32.totalorder %s37, 0
      %p371 = por %p369, %p370
      %p372 = scmp.ne.s32.totalorder %s360, %s361
      %p373 = scmp.eq.s32.totalorder %s38, 1
      %p374 = por %p372, %p373
      %p376 = scmp.ne.s32.totalorder %s361, %s375
      %p377 = scmp.eq.s32.totalorder %s38, 0
      %p378 = por %p376, %p377
      %s380 = sadd.s32 %s379, 1
      %p383 = scmp.eq.s32.totalorder %s32, 1
      %p384 = scmp.ne.s32.totalorder %s379, %s381
      %p385 = scmp.eq.s32.totalorder %s32, 0
      %p386 = por %p384, %p385
      %p387 = scmp.ne.s32.totalorder %s379, %s381
      %p388 = scmp.eq.s32.totalorder %s37, 1
      %p389 = por %p387, %p388
      %p390 = scmp.ne.s32.totalorder %s381, %s382
      %p391 = scmp.eq.s32.totalorder %s37, 0
      %p392 = por %p390, %p391
      %p393 = scmp.ne.s32.totalorder %s381, %s382
      %p394 = scmp.eq.s32.totalorder %s38, 1
      %p395 = por %p393, %p394
      %p397 = scmp.ne.s32.totalorder %s382, %s396
      %p398 = scmp.eq.s32.totalorder %s38, 0
      %p399 = por %p397, %p398
      %s401 = sadd.s32 %s400, 1
      %p404 = scmp.eq.s32.totalorder %s32, 1
      %p405 = scmp.ne.s32.totalorder %s400, %s402
      %p406 = scmp.eq.s32.totalorder %s32, 0
      %p407 = por %p405, %p406
      %p408 = scmp.ne.s32.totalorder %s400, %s402
      %p409 = scmp.eq.s32.totalorder %s37, 1
      %p410 = por %p408, %p409
      %p411 = scmp.ne.s32.totalorder %s402, %s403
      %p412 = scmp.eq.s32.totalorder %s37, 0
      %p413 = por %p411, %p412
      %p414 = scmp.ne.s32.totalorder %s402, %s403
      %p415 = scmp.eq.s32.totalorder %s38, 1
      %p416 = por %p414, %p415
      %p418 = scmp.ne.s32.totalorder %s403, %s417
      %p419 = scmp.eq.s32.totalorder %s38, 0
      %p420 = por %p418, %p419
      %s422 = sadd.s32 %s421, 1
      %p425 = scmp.eq.s32.totalorder %s32, 1
      %p426 = scmp.ne.s32.totalorder %s421, %s423
      %p427 = scmp.eq.s32.totalorder %s32, 0
      %p428 = por %p426, %p427
      %p429 = scmp.ne.s32.totalorder %s421, %s423
      %p430 = scmp.eq.s32.totalorder %s37, 1
      %p431 = por %p429, %p430
      %p432 = scmp.ne.s32.totalorder %s423, %s424
      %p433 = scmp.eq.s32.totalorder %s37, 0
      %p434 = por %p432, %p433
      %p435 = scmp.ne.s32.totalorder %s423, %s424
      %p436 = scmp.eq.s32.totalorder %s38, 1
      %p437 = por %p435, %p436
      %p439 = scmp.ne.s32.totalorder %s424, %s438
      %p440 = scmp.eq.s32.totalorder %s38, 0
      %p441 = por %p439, %p440
      %s442 = ssub.s32 %s39, %s51
      %s443 = ssub.s32 %s40, %s47
      %s444 = sor.u32 %s442, %s443
      %p445 = scmp.eq.s32.totalorder %s444, 0
      %s447 = sadd.s32 %s446, 1
      %s448 = scalar_select %p445, %s446, %s447
      %p451 = pneg %p445
      %p452 = scmp.eq.s32.totalorder %s32, 1
      %p453 = por %p451, %p452
      %p454 = scmp.ne.s32.totalorder %s446, %s449
      %p455 = scmp.eq.s32.totalorder %s32, 0
      %p456 = por %p454, %p455
      %p457 = scmp.ne.s32.totalorder %s446, %s449
      %p458 = scmp.eq.s32.totalorder %s37, 1
      %p459 = por %p457, %p458
      %p460 = scmp.ne.s32.totalorder %s449, %s450
      %p461 = scmp.eq.s32.totalorder %s37, 0
      %p462 = por %p460, %p461
      %p463 = scmp.ne.s32.totalorder %s449, %s450
      %p464 = scmp.eq.s32.totalorder %s38, 1
      %p465 = por %p463, %p464
      %p467 = scmp.ne.s32.totalorder %s450, %s466
      %p468 = scmp.eq.s32.totalorder %s38, 0
      %p469 = por %p467, %p468
      %p470 = scmp.le.s32.totalorder 1, %s32
      %p471 = scmp.lt.s32.totalorder %s32, 3
      %p472 = pnand %p470, %p471
      %p473 = pneg %p472
      // Predicated region
      $region9: #{transformer_encoder.1} parent=5 // pred_check
        _
      $region10: #{transformer_encoder.1} parent=5 // pred_check_branch
        %475 = sbr.rel (%p472) target = $region12
      $region11: #{transformer_encoder.1} parent=5 // pred_region
        %s476 = ssub.s32 %s32, 1
        // Predicated region
        $region13: #{transformer_encoder.1} parent=11 // pred_check
          %p477 = pneg %p119
        $region14: #{transformer_encoder.1} parent=11 // pred_check_branch
          %479 = sbr.rel (%p477) target = $region16
        $region15: #{transformer_encoder.1} parent=11 // pred_region
          _
        $region16: #{transformer_encoder.1} parent=11 // pred_fallthru
          _
        // Predicated region
        $region17: #{transformer_encoder.1} parent=11 // pred_check
          %p480 = pneg %p140
        $region18: #{transformer_encoder.1} parent=11 // pred_check_branch
          %482 = sbr.rel (%p480) target = $region20
        $region19: #{transformer_encoder.1} parent=11 // pred_region
          _
        $region20: #{transformer_encoder.1} parent=11 // pred_fallthru
          _
        // Predicated region
        $region21: #{transformer_encoder.1} parent=11 // pred_check
          %p483 = pneg %p161
        $region22: #{transformer_encoder.1} parent=11 // pred_check_branch
          %485 = sbr.rel (%p483) target = $region24
        $region23: #{transformer_encoder.1} parent=11 // pred_region
          _
        $region24: #{transformer_encoder.1} parent=11 // pred_fallthru
          _
        // Predicated region
        $region25: #{transformer_encoder.1} parent=11 // pred_check
          %p486 = pneg %p182
        $region26: #{transformer_encoder.1} parent=11 // pred_check_branch
          %488 = sbr.rel (%p486) target = $region28
        $region27: #{transformer_encoder.1} parent=11 // pred_region
          _
        $region28: #{transformer_encoder.1} parent=11 // pred_fallthru
          _
        // Predicated region
        $region29: #{transformer_encoder.1} parent=11 // pred_check
          %p489 = pneg %p203
        $region30: #{transformer_encoder.1} parent=11 // pred_check_branch
          %491 = sbr.rel (%p489) target = $region32
        $region31: #{transformer_encoder.1} parent=11 // pred_region
          %493 = vsyncadd [#allocation7], 0
          %s494 = sshll.u32 %s6, 4
          %s495 = int_to_ptr.hbm [resolvable:$true] %s494
          %s496 = sshll.u32 [#allocation6], 4
          %s497 = int_to_ptr.vmem [resolvable:$true] %s496
          %502 = dma.hbm_to_vmem [thread:$0]  %s495, 256, %s497, [#allocation7], 64, 64, 4
        $region32: #{transformer_encoder.1} parent=11 // pred_fallthru
          _
        // Predicated region
        $region33: #{transformer_encoder.1} parent=11 // pred_check
          %p503 = pneg %p224
        $region34: #{transformer_encoder.1} parent=11 // pred_check_branch
          %505 = sbr.rel (%p503) target = $region36
        $region35: #{transformer_encoder.1} parent=11 // pred_region
          %507 = vsyncadd [#allocation10], 0
          %s509 = sshll.u32 %s7, 4
          %s510 = int_to_ptr.hbm [resolvable:$true] %s509
          %s511 = sshll.u32 [#allocation9], 4
          %s512 = int_to_ptr.vmem [resolvable:$true] %s511
          %514 = dma.hbm_to_vmem [thread:$0]  %s510, 16, %s512, [#allocation10]
        $region36: #{transformer_encoder.1} parent=11 // pred_fallthru
          _
        // Predicated region
        $region37: #{transformer_encoder.1} parent=11 // pred_check
          %p515 = pneg %p245
        $region38: #{transformer_encoder.1} parent=11 // pred_check_branch
          %517 = sbr.rel (%p515) target = $region40
        $region39: #{transformer_encoder.1} parent=11 // pred_region
          %519 = vsyncadd [#allocation10], 0
          %s520 = sshll.u32 %s8, 4
          %s521 = int_to_ptr.hbm [resolvable:$true] %s520
          %s522 = sshll.u32 [#allocation11], 4
          %s523 = int_to_ptr.vmem [resolvable:$true] %s522
          %528 = dma.hbm_to_vmem [thread:$0]  %s521, 256, %s523, [#allocation10], 64, 64, 4
        $region40: #{transformer_encoder.1} parent=11 // pred_fallthru
          _
        // Predicated region
        $region41: #{transformer_encoder.1} parent=11 // pred_check
          %p529 = pneg %p266
        $region42: #{transformer_encoder.1} parent=11 // pred_check_branch
          %531 = sbr.rel (%p529) target = $region44
        $region43: #{transformer_encoder.1} parent=11 // pred_region
          _
        $region44: #{transformer_encoder.1} parent=11 // pred_fallthru
          _
        // Predicated region
        $region45: #{transformer_encoder.1} parent=11 // pred_check
          %p532 = pneg %p287
        $region46: #{transformer_encoder.1} parent=11 // pred_check_branch
          %534 = sbr.rel (%p532) target = $region48
        $region47: #{transformer_encoder.1} parent=11 // pred_region
          %536 = vsyncadd [#allocation13], 0
          %s537 = sshll.u32 %s10, 4
          %s538 = int_to_ptr.hbm [resolvable:$true] %s537
          %s539 = sshll.u32 [#allocation12], 4
          %s540 = int_to_ptr.vmem [resolvable:$true] %s539
          %545 = dma.hbm_to_vmem [thread:$0]  %s538, 256, %s540, [#allocation13], 64, 64, 4
        $region48: #{transformer_encoder.1} parent=11 // pred_fallthru
          _
        // Predicated region
        $region49: #{transformer_encoder.1} parent=11 // pred_check
          %p546 = pneg %p308
        $region50: #{transformer_encoder.1} parent=11 // pred_check_branch
          %548 = sbr.rel (%p546) target = $region52
        $region51: #{transformer_encoder.1} parent=11 // pred_region
          %550 = vsyncadd [#allocation13], 0
          %s552 = sshll.u32 %s11, 4
          %s553 = int_to_ptr.hbm [resolvable:$true] %s552
          %s554 = sshll.u32 [#allocation14], 4
          %s555 = int_to_ptr.vmem [resolvable:$true] %s554
          %557 = dma.hbm_to_vmem [thread:$0]  %s553, 16, %s555, [#allocation13]
        $region52: #{transformer_encoder.1} parent=11 // pred_fallthru
          _
        // Predicated region
        $region53: #{transformer_encoder.1} parent=11 // pred_check
          %p558 = pneg %p329
        $region54: #{transformer_encoder.1} parent=11 // pred_check_branch
          %560 = sbr.rel (%p558) target = $region56
        $region55: #{transformer_encoder.1} parent=11 // pred_region
          _
        $region56: #{transformer_encoder.1} parent=11 // pred_fallthru
          _
        // Predicated region
        $region57: #{transformer_encoder.1} parent=11 // pred_check
          %p561 = pneg %p350
        $region58: #{transformer_encoder.1} parent=11 // pred_check_branch
          %563 = sbr.rel (%p561) target = $region60
        $region59: #{transformer_encoder.1} parent=11 // pred_region
          _
        $region60: #{transformer_encoder.1} parent=11 // pred_fallthru
          _
        // Predicated region
        $region61: #{transformer_encoder.1} parent=11 // pred_check
          %p564 = pneg %p371
        $region62: #{transformer_encoder.1} parent=11 // pred_check_branch
          %566 = sbr.rel (%p564) target = $region64
        $region63: #{transformer_encoder.1} parent=11 // pred_region
          %568 = vsyncadd [#allocation16], 0
          %s569 = sshll.u32 %s14, 4
          %s570 = int_to_ptr.hbm [resolvable:$true] %s569
          %s571 = sshll.u32 [#allocation15], 4
          %s572 = int_to_ptr.vmem [resolvable:$true] %s571
          %577 = dma.hbm_to_vmem [thread:$0]  %s570, 256, %s572, [#allocation16], 64, 64, 4
        $region64: #{transformer_encoder.1} parent=11 // pred_fallthru
          _
        // Predicated region
        $region65: #{transformer_encoder.1} parent=11 // pred_check
          %p578 = pneg %p392
        $region66: #{transformer_encoder.1} parent=11 // pred_check_branch
          %580 = sbr.rel (%p578) target = $region68
        $region67: #{transformer_encoder.1} parent=11 // pred_region
          %582 = vsyncadd [#allocation16], 0
          %s584 = sshll.u32 %s15, 4
          %s585 = int_to_ptr.hbm [resolvable:$true] %s584
          %s586 = sshll.u32 [#allocation17], 4
          %s587 = int_to_ptr.vmem [resolvable:$true] %s586
          %589 = dma.hbm_to_vmem [thread:$0]  %s585, 16, %s587, [#allocation16]
        $region68: #{transformer_encoder.1} parent=11 // pred_fallthru
          _
        // Predicated region
        $region69: #{transformer_encoder.1} parent=11 // pred_check
          %p590 = pneg %p413
        $region70: #{transformer_encoder.1} parent=11 // pred_check_branch
          %592 = sbr.rel (%p590) target = $region72
        $region71: #{transformer_encoder.1} parent=11 // pred_region
          _
        $region72: #{transformer_encoder.1} parent=11 // pred_fallthru
          _
        // Predicated region
        $region73: #{transformer_encoder.1} parent=11 // pred_check
          %p593 = pneg %p434
        $region74: #{transformer_encoder.1} parent=11 // pred_check_branch
          %595 = sbr.rel (%p593) target = $region76
        $region75: #{transformer_encoder.1} parent=11 // pred_region
          %597 = vsyncadd [#allocation19], 0
          %s599 = sshll.u32 %s17, 4
          %s600 = int_to_ptr.hbm [resolvable:$true] %s599
          %s601 = sshll.u32 [#allocation18], 4
          %s602 = int_to_ptr.vmem [resolvable:$true] %s601
          %604 = dma.hbm_to_vmem [thread:$0]  %s600, 16, %s602, [#allocation19]
        $region76: #{transformer_encoder.1} parent=11 // pred_fallthru
          _
      $region12: #{transformer_encoder.1} parent=5 // pred_fallthru
        _
      %p605 = scmp.lt.s32.totalorder %s32, 2
      // Predicated region
      $region77: #{transformer_encoder.1} parent=5 // pred_check
        %p606 = pneg %p605
      $region78: #{transformer_encoder.1} parent=5 // pred_check_branch
        %608 = sbr.rel (%p606) target = $region80
      $region79: #{transformer_encoder.1} parent=5 // pred_region
        // Predicated region
        $region81: #{transformer_encoder.1} parent=79 // pred_check
          %p609 = pneg %p64
        $region82: #{transformer_encoder.1} parent=79 // pred_check_branch
          %611 = sbr.rel (%p609) target = $region84
        $region83: #{transformer_encoder.1} parent=79 // pred_region
          %p612 = scmp.lt.s32.totalorder %s39, 1
          %s613 = scalar_select %p612, %s39, 1
          %s614 = smul.addr %s613, 2
          %s615 = smul.addr %s614, 8
          %s616 = scalar_lea.vmem %s0, %s615
        $region84: #{transformer_encoder.1} parent=79 // pred_fallthru
          _
        // Predicated region
        $region85: #{transformer_encoder.1} parent=79 // pred_check
          %p617 = pneg %p92
        $region86: #{transformer_encoder.1} parent=79 // pred_check_branch
          %619 = sbr.rel (%p617) target = $region88
        $region87: #{transformer_encoder.1} parent=79 // pred_region
          %s620 = smul.u32 2, %s40
          %p621 = scmp.lt.s32.totalorder %s39, 1
          %s622 = scalar_select %p621, %s39, 1
          %p623 = scmp.lt.s32.totalorder %s620, 1
          %s624 = scalar_select %p623, %s620, 1
          %s625 = smul.addr %s622, 2
          %s626 = sadd.s32 %s624, %s625
          %s627 = smul.addr %s626, 8
          %s628 = scalar_lea.vmem %s1, %s627
          %s629 = smul.u32 2, %s40
        $region88: #{transformer_encoder.1} parent=79 // pred_fallthru
          _
      $region80: #{transformer_encoder.1} parent=5 // pred_fallthru
        _
      %p630 = scmp.le.s32.totalorder 1, %s32
      %p631 = scmp.lt.s32.totalorder %s32, 3
      %p632 = pnand %p630, %p631
      %p633 = pneg %p632
      // Predicated region
      $region89: #{transformer_encoder.1} parent=5 // pred_check
        _
      $region90: #{transformer_encoder.1} parent=5 // pred_check_branch
        %635 = sbr.rel (%p632) target = $region92
      $region91: #{transformer_encoder.1} parent=5 // pred_region
        %s636 = ssub.s32 %s32, 1
        // Predicated region
        $region93: #{transformer_encoder.1} parent=91 // pred_check
          %p637 = pneg %p203
        $region94: #{transformer_encoder.1} parent=91 // pred_check_branch
          %639 = sbr.rel (%p637) target = $region96
        $region95: #{transformer_encoder.1} parent=91 // pred_region
          %641 = dma.done [#allocation7], 256
        $region96: #{transformer_encoder.1} parent=91 // pred_fallthru
          _
        // Predicated region
        $region97: #{transformer_encoder.1} parent=91 // pred_check
          %p642 = pneg %p224
        $region98: #{transformer_encoder.1} parent=91 // pred_check_branch
          %644 = sbr.rel (%p642) target = $region100
        $region99: #{transformer_encoder.1} parent=91 // pred_region
          %646 = dma.done [#allocation10], 16
        $region100: #{transformer_encoder.1} parent=91 // pred_fallthru
          _
        // Predicated region
        $region101: #{transformer_encoder.1} parent=91 // pred_check
          %p647 = pneg %p245
        $region102: #{transformer_encoder.1} parent=91 // pred_check_branch
          %649 = sbr.rel (%p647) target = $region104
        $region103: #{transformer_encoder.1} parent=91 // pred_region
          %651 = dma.done [#allocation10], 256
        $region104: #{transformer_encoder.1} parent=91 // pred_fallthru
          _
        // Predicated region
        $region105: #{transformer_encoder.1} parent=91 // pred_check
          %p652 = pneg %p287
        $region106: #{transformer_encoder.1} parent=91 // pred_check_branch
          %654 = sbr.rel (%p652) target = $region108
        $region107: #{transformer_encoder.1} parent=91 // pred_region
          %656 = dma.done [#allocation13], 256
        $region108: #{transformer_encoder.1} parent=91 // pred_fallthru
          _
        // Predicated region
        $region109: #{transformer_encoder.1} parent=91 // pred_check
          %p657 = pneg %p308
        $region110: #{transformer_encoder.1} parent=91 // pred_check_branch
          %659 = sbr.rel (%p657) target = $region112
        $region111: #{transformer_encoder.1} parent=91 // pred_region
          %661 = dma.done [#allocation13], 16
        $region112: #{transformer_encoder.1} parent=91 // pred_fallthru
          _
        // Predicated region
        $region113: #{transformer_encoder.1} parent=91 // pred_check
          %p662 = pneg %p371
        $region114: #{transformer_encoder.1} parent=91 // pred_check_branch
          %664 = sbr.rel (%p662) target = $region116
        $region115: #{transformer_encoder.1} parent=91 // pred_region
          %666 = dma.done [#allocation16], 256
        $region116: #{transformer_encoder.1} parent=91 // pred_fallthru
          _
        // Predicated region
        $region117: #{transformer_encoder.1} parent=91 // pred_check
          %p667 = pneg %p392
        $region118: #{transformer_encoder.1} parent=91 // pred_check_branch
          %669 = sbr.rel (%p667) target = $region120
        $region119: #{transformer_encoder.1} parent=91 // pred_region
          %671 = dma.done [#allocation16], 16
        $region120: #{transformer_encoder.1} parent=91 // pred_fallthru
          _
        // Predicated region
        $region121: #{transformer_encoder.1} parent=91 // pred_check
          %p672 = pneg %p434
        $region122: #{transformer_encoder.1} parent=91 // pred_check_branch
          %674 = sbr.rel (%p672) target = $region124
        $region123: #{transformer_encoder.1} parent=91 // pred_region
          %676 = dma.done [#allocation19], 16
        $region124: #{transformer_encoder.1} parent=91 // pred_fallthru
          _
        %p677 = scmp.lt.s32.totalorder %s41, 1
        %s678 = scalar_select %p677, %s41, 1
        %s679 = smul.addr %s678, 2
        %s680 = smul.addr %s679, 8
        %s681 = scalar_lea.vmem %s0, %s680
        %p682 = pneg %p70
        %p683 = pneg %p67
        %s684 = smul.u32 2, %s42
        %p685 = scmp.lt.s32.totalorder %s41, 1
        %s686 = scalar_select %p685, %s41, 1
        %p687 = scmp.lt.s32.totalorder %s684, 1
        %s688 = scalar_select %p687, %s684, 1
        %s689 = smul.addr %s686, 2
        %s690 = sadd.s32 %s688, %s689
        %s691 = smul.addr %s690, 8
        %s692 = scalar_lea.vmem %s1, %s691
        %p693 = pneg %p98
        %p694 = pneg %p95
        %p695 = pneg %p119
        %p696 = pneg %p116
        %p697 = pneg %p140
        %p698 = pneg %p137
        %p699 = pneg %p161
        %p700 = pneg %p158
        %p701 = pneg %p182
        %p702 = pneg %p179
        %p703 = pneg %p203
        %p704 = pneg %p200
        %p705 = pneg %p224
        %p706 = pneg %p221
        %p707 = pneg %p245
        %p708 = pneg %p242
        %p709 = pneg %p266
        %p710 = pneg %p263
        %p711 = pneg %p287
        %p712 = pneg %p284
        %p713 = pneg %p308
        %p714 = pneg %p305
        %p715 = pneg %p329
        %p716 = pneg %p326
        %p717 = pneg %p350
        %p718 = pneg %p347
        %p719 = pneg %p371
        %p720 = pneg %p368
        %p721 = pneg %p392
        %p722 = pneg %p389
        %p723 = pneg %p413
        %p724 = pneg %p410
        %p725 = pneg %p434
        %p726 = pneg %p431
        %p727 = pneg %p462
        %p728 = pneg %p459
        %s729 = sand.u32 %s449, 1
        %s730 = scalar_lea.sflag [#allocation8], %s729
        %s731 = sand.u32 %s449, 1
        %s732 = smul.addr %s731, 16
        %s733 = scalar_lea.vmem [#allocation20], %s732
        %p734 = scmp.lt.s32.totalorder %s41, 1
        %s735 = scalar_select %p734, %s41, 1
        %s736 = smul.addr %s735, 2
        %s737 = smul.addr %s736, 8
        %s738 = scalar_lea.vmem %s0, %s737
        %s739 = smul.u32 2, %s42
        %p740 = scmp.lt.s32.totalorder %s41, 1
        %s741 = scalar_select %p740, %s41, 1
        %p742 = scmp.lt.s32.totalorder %s739, 1
        %s743 = scalar_select %p742, %s739, 1
        %s744 = smul.addr %s741, 2
        %s745 = sadd.s32 %s743, %s744
        %s746 = smul.addr %s745, 8
        %s747 = scalar_lea.vmem %s1, %s746
        %s748 = smul.u32 2, %s42
        %s749 = smul.u32 2, %s42
        %v751 = vld [vmem:[%s738] sm:$0xff]
        %v752 = vld [vmem:[%s738 + $0x8] sm:$0xff]
        %vm753 = vcmask 261120
        %v754 = vsel %vm753, %v751, 0.0
        %755 = vadd.xlane.f32.xlu0 %v754
        %v756 = vpop.xlane.xlu0 %755
        %v757 = vsel %vm753, %v752, 0.0
        %758 = vadd.xlane.f32.xlu0 %v757
        %v759 = vpop.xlane.xlu0 %758
        %v760 = vrcp.pop 32.0
        %v761 = vmul.f32 32.0, %v760
        %v762 = vsub.f32 1.0, %v761
        %v763 = vmul.f32 %v760, %v762
        %v764 = vadd.f32 %v760, %v763
        %vm765 = vweird.f32 %v760
        %v766 = vsel %vm765, %v760, %v764
        %v767 = vmul.f32 %v756, %v766
        %v768 = vmul.f32 %v759, %v766
        %v769 = vsub.f32 %v751, %v767
        %v770 = vsub.f32 %v752, %v768
        %v771 = vmul.f32 %v769, %v769
        %v772 = vmul.f32 %v770, %v770
        %v773 = vsel %vm753, %v771, 0.0
        %774 = vadd.xlane.f32.xlu0 %v773
        %v775 = vpop.xlane.xlu0 %774
        %v776 = vsel %vm753, %v772, 0.0
        %777 = vadd.xlane.f32.xlu0 %v776
        %v778 = vpop.xlane.xlu0 %777
        %v779 = vmul.f32 %v775, %v766
        %v780 = vmul.f32 %v778, %v766
        %v781 = vadd.f32 %v779, 1e-05
        %v782 = vadd.f32 %v780, 1e-05
        %v783 = vrsqrt.pop %v781
        %v784 = vmul.f32 %v783, %v781
        %v785 = vmul.f32 %v784, %v783
        %v786 = vmul.f32 0.5, %v785
        %v787 = vsub.f32 1.5, %v786
        %v788 = vmul.f32 %v783, %v787
        %vm789 = vweird.f32 %v781
        %vm790 = vweird.f32 %v783
        %vm791 = vmor %vm789, %vm790
        %v792 = vsel %vm791, %v783, %v788
        %v793 = vrsqrt.pop %v782
        %v794 = vmul.f32 %v793, %v782
        %v795 = vmul.f32 %v794, %v793
        %v796 = vmul.f32 0.5, %v795
        %v797 = vsub.f32 1.5, %v796
        %v798 = vmul.f32 %v793, %v797
        %vm799 = vweird.f32 %v782
        %vm800 = vweird.f32 %v793
        %vm801 = vmor %vm799, %vm800
        %v802 = vsel %vm801, %v793, %v798
        %v803 = vmul.f32 %v769, %v792
        %v804 = vmul.f32 %v770, %v802
        %v805 = vld [vmem:[%s2] sm:$0x1]
        %v807 = vperm.slane %v805, 0
        %v809 = vmul.f32 %v803, %v807
        %v810 = vmul.f32 %v804, %v807
        %v811 = vld [vmem:[%s3] sm:$0x1]
        %v813 = vperm.slane %v811, 0
        %v815 = vadd.f32 %v809, %v813
        %v816 = vadd.f32 %v810, %v813
        %v817 = vpack.c.bf16 %v816, %v815
        %v818 = vld [vmem:[%s4] sm:$0xf]
        %v819 = vld [vmem:[%s4 + $0x4] sm:$0xf]
        %v820 = vld [vmem:[%s4 + $0x8] sm:$0xf]
        %v821 = vld [vmem:[%s4 + $0xc] sm:$0xf]
        %v822 = vld [vmem:[%s5] sm:$0x1]
        %v824 = vperm.slane %v822, 0
        %v830 = vunpack.c.l.b16 %v818
        %v831 = vunpack.c.l.b16 %v819
        %v832 = vunpack.c.l.b16 %v820
        %v833 = vunpack.c.l.b16 %v821
        %v834 = vpack.c.b16 %v831, %v830
        %v835 = vpack.c.b16 %v833, %v832
        %v839 = vsel %vm753, %v817, 0
        %841 = vmatpush.bf16.msra.mxu0 0
        %842 = vmatpush.bf16.msra.mxu0 0
        %843 = vmatpush.bf16.msra.mxu0 0
        %844 = vmatpush.bf16.msra.mxu0 0
        %845 = vmatpush.bf16.msra.mxu0 0
        %846 = vmatpush.bf16.msra.mxu0 0
        %847 = vmatpush.bf16.msra.mxu0 %v835
        %848 = vmatpush.bf16.msra.mxu0 %v834
        %849 = vmatmul.bf16.gmra.mxu0 %v839
        %v850 = vpop.f32.mrf.mxu0
        %v851 = vadd.f32 %v824, %v850
        %v852 = vpop.f32.mrf.mxu0
        %v853 = vadd.f32 %v824, %v852
        %854 = vdwg.mxu0
        %v855 = vpack.c.bf16 %v851, %v851
        %v856 = vpack.c.bf16 %v853, %v853
        %859 = vrot.lane.b32.xlu0 %v855, 120
        %v860 = vpop.permute.xlu0 %859
        %861 = vrot.lane.b32.xlu0 %v856, 120
        %v862 = vpop.permute.xlu0 %861
        %863 = vrot.lane.b32.xlu0 %v855, 112
        %v864 = vpop.permute.xlu0 %863
        %865 = vrot.lane.b32.xlu0 %v856, 112
        %v866 = vpop.permute.xlu0 %865
        %867 = vrot.lane.b32.xlu0 %v855, 104
        %v868 = vpop.permute.xlu0 %867
        %869 = vrot.lane.b32.xlu0 %v856, 104
        %v870 = vpop.permute.xlu0 %869
        %v873 = vpack.i.b16 %v860, %v855
        %v874 = vshrl.u32 %v855, 16
        %v875 = vshrl.u32 %v860, 16
        %v876 = vpack.i.b16 %v875, %v874
        %v879 = vpack.i.b16 %v868, %v864
        %v880 = vshrl.u32 %v864, 16
        %v881 = vshrl.u32 %v868, 16
        %v882 = vpack.i.b16 %v881, %v880
        %v885 = vpack.i.b16 %v862, %v856
        %v886 = vshrl.u32 %v856, 16
        %v887 = vshrl.u32 %v862, 16
        %v888 = vpack.i.b16 %v887, %v886
        %v891 = vpack.i.b16 %v870, %v866
        %v892 = vshrl.u32 %v866, 16
        %v893 = vshrl.u32 %v870, 16
        %v894 = vpack.i.b16 %v893, %v892
        %v897 = vunpack.c.l.s4 1983009808
        %v898 = vunpack.c.0.s8 %v897
        %v899 = vperm.slane %v873, %v898
        %v902 = vunpack.c.l.s4 1983009808
        %v903 = vunpack.c.0.s8 %v902
        %v904 = vperm.slane %v879, %v903
        %v905 = vrot.slane %v904, 4
        %vm906 = vcmask 1047556
        %v907 = vsel %vm906, %v905, %v899
        %v908 = vrot.slane %v899, 4
        %v909 = vsel %vm906, %v904, %v908
        %v911 = vunpack.c.l.s4 1934713408
        %v912 = vunpack.c.0.s8 %v911
        %v913 = vperm.slane %v907, %v912
        %v915 = vunpack.c.l.s4 1934713408
        %v916 = vunpack.c.0.s8 %v915
        %v917 = vperm.slane %v909, %v916
        %v918 = vrot.slane %v913, 4
        %v919 = vsel %vm906, 0, %v918
        %v920 = vrot.slane %v917, 4
        %v921 = vsel %vm906, 0, %v920
        %v924 = vunpack.c.l.s4 1983009808
        %v925 = vunpack.c.0.s8 %v924
        %v926 = vperm.slane %v876, %v925
        %v929 = vunpack.c.l.s4 1983009808
        %v930 = vunpack.c.0.s8 %v929
        %v931 = vperm.slane %v882, %v930
        %v932 = vrot.slane %v931, 4
        %v933 = vsel %vm906, %v932, %v926
        %v934 = vrot.slane %v926, 4
        %v935 = vsel %vm906, %v931, %v934
        %v937 = vunpack.c.l.s4 1934713408
        %v938 = vunpack.c.0.s8 %v937
        %v939 = vperm.slane %v933, %v938
        %v941 = vunpack.c.l.s4 1934713408
        %v942 = vunpack.c.0.s8 %v941
        %v943 = vperm.slane %v935, %v942
        %v944 = vrot.slane %v939, 4
        %v945 = vsel %vm906, 0, %v944
        %v946 = vrot.slane %v943, 4
        %v947 = vsel %vm906, 0, %v946
        %v950 = vunpack.c.l.s4 1983009808
        %v951 = vunpack.c.0.s8 %v950
        %v952 = vperm.slane %v885, %v951
        %v955 = vunpack.c.l.s4 1983009808
        %v956 = vunpack.c.0.s8 %v955
        %v957 = vperm.slane %v891, %v956
        %v958 = vrot.slane %v957, 4
        %v959 = vsel %vm906, %v958, %v952
        %v960 = vrot.slane %v952, 4
        %v961 = vsel %vm906, %v957, %v960
        %v963 = vunpack.c.l.s4 1934713408
        %v964 = vunpack.c.0.s8 %v963
        %v965 = vperm.slane %v959, %v964
        %v967 = vunpack.c.l.s4 1934713408
        %v968 = vunpack.c.0.s8 %v967
        %v969 = vperm.slane %v961, %v968
        %v970 = vrot.slane %v965, 4
        %v971 = vsel %vm906, 0, %v970
        %v972 = vrot.slane %v969, 4
        %v973 = vsel %vm906, 0, %v972
        %v976 = vunpack.c.l.s4 1983009808
        %v977 = vunpack.c.0.s8 %v976
        %v978 = vperm.slane %v888, %v977
        %v981 = vunpack.c.l.s4 1983009808
        %v982 = vunpack.c.0.s8 %v981
        %v983 = vperm.slane %v894, %v982
        %v984 = vrot.slane %v983, 4
        %v985 = vsel %vm906, %v984, %v978
        %v986 = vrot.slane %v978, 4
        %v987 = vsel %vm906, %v983, %v986
        %v989 = vunpack.c.l.s4 1934713408
        %v990 = vunpack.c.0.s8 %v989
        %v991 = vperm.slane %v985, %v990
        %v993 = vunpack.c.l.s4 1934713408
        %v994 = vunpack.c.0.s8 %v993
        %v995 = vperm.slane %v987, %v994
        %v996 = vrot.slane %v991, 4
        %v997 = vsel %vm906, 0, %v996
        %v998 = vrot.slane %v995, 4
        %v999 = vsel %vm906, 0, %v998
        %v1000 = vsel %vm906, %v920, %v913
        %v1002 = vunpack.c.l.s4 1983009808
        %v1003 = vunpack.c.0.s8 %v1002
        %v1004 = vperm.slane %v1000, %v1003
        %v1005 = vrot.slane %v921, 4
        %v1006 = vsel %vm906, %v1005, %v919
        %v1008 = vunpack.c.l.s4 1983009808
        %v1009 = vunpack.c.0.s8 %v1008
        %v1010 = vperm.slane %v1006, %v1009
        %v1011 = vrot.slane %v1010, 4
        %v1012 = vsel %vm906, %v1011, %v1004
        %v1014 = vunpack.c.l.s4 1934713408
        %v1015 = vunpack.c.0.s8 %v1014
        %v1016 = vperm.slane %v1012, %v1015
        %v1017 = vrot.slane %v1016, 4
        %v1018 = vsel %vm906, 0, %v1017
        %v1019 = vsel %vm906, %v946, %v939
        %v1021 = vunpack.c.l.s4 1983009808
        %v1022 = vunpack.c.0.s8 %v1021
        %v1023 = vperm.slane %v1019, %v1022
        %v1024 = vrot.slane %v947, 4
        %v1025 = vsel %vm906, %v1024, %v945
        %v1027 = vunpack.c.l.s4 1983009808
        %v1028 = vunpack.c.0.s8 %v1027
        %v1029 = vperm.slane %v1025, %v1028
        %v1030 = vrot.slane %v1029, 4
        %v1031 = vsel %vm906, %v1030, %v1023
        %v1033 = vunpack.c.l.s4 1934713408
        %v1034 = vunpack.c.0.s8 %v1033
        %v1035 = vperm.slane %v1031, %v1034
        %v1036 = vrot.slane %v1035, 4
        %v1037 = vsel %vm906, 0, %v1036
        %v1038 = vsel %vm906, %v972, %v965
        %v1040 = vunpack.c.l.s4 1983009808
        %v1041 = vunpack.c.0.s8 %v1040
        %v1042 = vperm.slane %v1038, %v1041
        %v1043 = vrot.slane %v973, 4
        %v1044 = vsel %vm906, %v1043, %v971
        %v1046 = vunpack.c.l.s4 1983009808
        %v1047 = vunpack.c.0.s8 %v1046
        %v1048 = vperm.slane %v1044, %v1047
        %v1049 = vrot.slane %v1048, 4
        %v1050 = vsel %vm906, %v1049, %v1042
        %v1052 = vunpack.c.l.s4 1934713408
        %v1053 = vunpack.c.0.s8 %v1052
        %v1054 = vperm.slane %v1050, %v1053
        %v1055 = vrot.slane %v1054, 4
        %v1056 = vsel %vm906, 0, %v1055
        %v1057 = vsel %vm906, %v998, %v991
        %v1059 = vunpack.c.l.s4 1983009808
        %v1060 = vunpack.c.0.s8 %v1059
        %v1061 = vperm.slane %v1057, %v1060
        %v1062 = vrot.slane %v999, 4
        %v1063 = vsel %vm906, %v1062, %v997
        %v1065 = vunpack.c.l.s4 1983009808
        %v1066 = vunpack.c.0.s8 %v1065
        %v1067 = vperm.slane %v1063, %v1066
        %v1068 = vrot.slane %v1067, 4
        %v1069 = vsel %vm906, %v1068, %v1061
        %v1071 = vunpack.c.l.s4 1934713408
        %v1072 = vunpack.c.0.s8 %v1071
        %v1073 = vperm.slane %v1069, %v1072
        %v1074 = vrot.slane %v1073, 4
        %v1075 = vsel %vm906, 0, %v1074
        %v1078 = vpack.i.b16 %v1035, %v1016
        %v1080 = vshrl.u32 %v1016, 16
        %v1081 = vshrl.u32 %v1035, 16
        %v1082 = vpack.i.b16 %v1081, %v1080
        %v1086 = vpack.i.b16 %v1037, %v1018
        %v1088 = vshrl.u32 %v1018, 16
        %v1089 = vshrl.u32 %v1037, 16
        %v1090 = vpack.i.b16 %v1089, %v1088
        %v1094 = vpack.i.b16 %v1073, %v1054
        %v1096 = vshrl.u32 %v1054, 16
        %v1097 = vshrl.u32 %v1073, 16
        %v1098 = vpack.i.b16 %v1097, %v1096
        %v1102 = vpack.i.b16 %v1075, %v1056
        %v1104 = vshrl.u32 %v1056, 16
        %v1105 = vshrl.u32 %v1075, 16
        %v1106 = vpack.i.b16 %v1105, %v1104
        %vm1108 = vcmask 60416
        %1109 = vst.msk [vmem:[#allocation2] sm:$0xf] %vm1108, %v1078
        %1110 = vst.msk [vmem:[#allocation2 + $0x4] sm:$0xf] %vm1108, %v1094
        %1111 = vst.msk [vmem:[#allocation2 + $0x8] sm:$0xf] %vm1108, %v1082
        %1112 = vst.msk [vmem:[#allocation2 + $0xc] sm:$0xf] %vm1108, %v1098
        %1113 = vst.msk [vmem:[#allocation2 + $0x10] sm:$0xf] %vm1108, %v1086
        %1114 = vst.msk [vmem:[#allocation2 + $0x14] sm:$0xf] %vm1108, %v1102
        %1115 = vst.msk [vmem:[#allocation2 + $0x18] sm:$0xf] %vm1108, %v1090
        %1116 = vst.msk [vmem:[#allocation2 + $0x1c] sm:$0xf] %vm1108, %v1106
        %v1117 = vld [vmem:[#allocation6] sm:$0xf]
        %v1118 = vld [vmem:[#allocation6 + $0x4] sm:$0xf]
        %v1119 = vld [vmem:[#allocation6 + $0x8] sm:$0xf]
        %v1120 = vld [vmem:[#allocation6 + $0xc] sm:$0xf]
        %v1121 = vld [vmem:[#allocation9] sm:$0x1]
        %v1123 = vperm.slane %v1121, 0
        %v1129 = vunpack.c.l.b16 %v1117
        %v1130 = vunpack.c.l.b16 %v1118
        %v1131 = vunpack.c.l.b16 %v1119
        %v1132 = vunpack.c.l.b16 %v1120
        %v1133 = vpack.c.b16 %v1130, %v1129
        %v1134 = vpack.c.b16 %v1132, %v1131
        %1137 = vmatpush.bf16.msra.mxu0 0
        %1138 = vmatpush.bf16.msra.mxu0 0
        %1139 = vmatpush.bf16.msra.mxu0 0
        %1140 = vmatpush.bf16.msra.mxu0 0
        %1141 = vmatpush.bf16.msra.mxu0 0
        %1142 = vmatpush.bf16.msra.mxu0 0
        %1143 = vmatpush.bf16.msra.mxu0 %v1134
        %1144 = vmatpush.bf16.msra.mxu0 %v1133
        %1145 = vmatmul.bf16.gmra.mxu0 %v839
        %v1146 = vpop.f32.mrf.mxu0
        %v1147 = vadd.f32 %v1123, %v1146
        %v1148 = vpop.f32.mrf.mxu0
        %v1149 = vadd.f32 %v1123, %v1148
        %1150 = vdwg.mxu0
        %v1151 = vpack.c.bf16 %v1147, %v1147
        %v1152 = vpack.c.bf16 %v1149, %v1149
        %1155 = vrot.lane.b32.xlu0 %v1151, 120
        %v1156 = vpop.permute.xlu0 %1155
        %1157 = vrot.lane.b32.xlu0 %v1152, 120
        %v1158 = vpop.permute.xlu0 %1157
        %1159 = vrot.lane.b32.xlu0 %v1151, 112
        %v1160 = vpop.permute.xlu0 %1159
        %1161 = vrot.lane.b32.xlu0 %v1152, 112
        %v1162 = vpop.permute.xlu0 %1161
        %1163 = vrot.lane.b32.xlu0 %v1151, 104
        %v1164 = vpop.permute.xlu0 %1163
        %1165 = vrot.lane.b32.xlu0 %v1152, 104
        %v1166 = vpop.permute.xlu0 %1165
        %v1169 = vpack.i.b16 %v1156, %v1151
        %v1170 = vshrl.u32 %v1151, 16
        %v1171 = vshrl.u32 %v1156, 16
        %v1172 = vpack.i.b16 %v1171, %v1170
        %v1175 = vpack.i.b16 %v1164, %v1160
        %v1176 = vshrl.u32 %v1160, 16
        %v1177 = vshrl.u32 %v1164, 16
        %v1178 = vpack.i.b16 %v1177, %v1176
        %v1181 = vpack.i.b16 %v1158, %v1152
        %v1182 = vshrl.u32 %v1152, 16
        %v1183 = vshrl.u32 %v1158, 16
        %v1184 = vpack.i.b16 %v1183, %v1182
        %v1187 = vpack.i.b16 %v1166, %v1162
        %v1188 = vshrl.u32 %v1162, 16
        %v1189 = vshrl.u32 %v1166, 16
        %v1190 = vpack.i.b16 %v1189, %v1188
        %v1193 = vunpack.c.l.s4 1983009808
        %v1194 = vunpack.c.0.s8 %v1193
        %v1195 = vperm.slane %v1169, %v1194
        %v1198 = vunpack.c.l.s4 1983009808
        %v1199 = vunpack.c.0.s8 %v1198
        %v1200 = vperm.slane %v1175, %v1199
        %v1201 = vrot.slane %v1200, 4
        %v1202 = vsel %vm906, %v1201, %v1195
        %v1203 = vrot.slane %v1195, 4
        %v1204 = vsel %vm906, %v1200, %v1203
        %v1206 = vunpack.c.l.s4 1934713408
        %v1207 = vunpack.c.0.s8 %v1206
        %v1208 = vperm.slane %v1202, %v1207
        %v1210 = vunpack.c.l.s4 1934713408
        %v1211 = vunpack.c.0.s8 %v1210
        %v1212 = vperm.slane %v1204, %v1211
        %v1213 = vrot.slane %v1208, 4
        %v1214 = vsel %vm906, 0, %v1213
        %v1215 = vrot.slane %v1212, 4
        %v1216 = vsel %vm906, 0, %v1215
        %v1219 = vunpack.c.l.s4 1983009808
        %v1220 = vunpack.c.0.s8 %v1219
        %v1221 = vperm.slane %v1172, %v1220
        %v1224 = vunpack.c.l.s4 1983009808
        %v1225 = vunpack.c.0.s8 %v1224
        %v1226 = vperm.slane %v1178, %v1225
        %v1227 = vrot.slane %v1226, 4
        %v1228 = vsel %vm906, %v1227, %v1221
        %v1229 = vrot.slane %v1221, 4
        %v1230 = vsel %vm906, %v1226, %v1229
        %v1232 = vunpack.c.l.s4 1934713408
        %v1233 = vunpack.c.0.s8 %v1232
        %v1234 = vperm.slane %v1228, %v1233
        %v1236 = vunpack.c.l.s4 1934713408
        %v1237 = vunpack.c.0.s8 %v1236
        %v1238 = vperm.slane %v1230, %v1237
        %v1239 = vrot.slane %v1234, 4
        %v1240 = vsel %vm906, 0, %v1239
        %v1241 = vrot.slane %v1238, 4
        %v1242 = vsel %vm906, 0, %v1241
        %v1245 = vunpack.c.l.s4 1983009808
        %v1246 = vunpack.c.0.s8 %v1245
        %v1247 = vperm.slane %v1181, %v1246
        %v1250 = vunpack.c.l.s4 1983009808
        %v1251 = vunpack.c.0.s8 %v1250
        %v1252 = vperm.slane %v1187, %v1251
        %v1253 = vrot.slane %v1252, 4
        %v1254 = vsel %vm906, %v1253, %v1247
        %v1255 = vrot.slane %v1247, 4
        %v1256 = vsel %vm906, %v1252, %v1255
        %v1258 = vunpack.c.l.s4 1934713408
        %v1259 = vunpack.c.0.s8 %v1258
        %v1260 = vperm.slane %v1254, %v1259
        %v1262 = vunpack.c.l.s4 1934713408
        %v1263 = vunpack.c.0.s8 %v1262
        %v1264 = vperm.slane %v1256, %v1263
        %v1265 = vrot.slane %v1260, 4
        %v1266 = vsel %vm906, 0, %v1265
        %v1267 = vrot.slane %v1264, 4
        %v1268 = vsel %vm906, 0, %v1267
        %v1271 = vunpack.c.l.s4 1983009808
        %v1272 = vunpack.c.0.s8 %v1271
        %v1273 = vperm.slane %v1184, %v1272
        %v1276 = vunpack.c.l.s4 1983009808
        %v1277 = vunpack.c.0.s8 %v1276
        %v1278 = vperm.slane %v1190, %v1277
        %v1279 = vrot.slane %v1278, 4
        %v1280 = vsel %vm906, %v1279, %v1273
        %v1281 = vrot.slane %v1273, 4
        %v1282 = vsel %vm906, %v1278, %v1281
        %v1284 = vunpack.c.l.s4 1934713408
        %v1285 = vunpack.c.0.s8 %v1284
        %v1286 = vperm.slane %v1280, %v1285
        %v1288 = vunpack.c.l.s4 1934713408
        %v1289 = vunpack.c.0.s8 %v1288
        %v1290 = vperm.slane %v1282, %v1289
        %v1291 = vrot.slane %v1286, 4
        %v1292 = vsel %vm906, 0, %v1291
        %v1293 = vrot.slane %v1290, 4
        %v1294 = vsel %vm906, 0, %v1293
        %v1295 = vsel %vm906, %v1215, %v1208
        %v1297 = vunpack.c.l.s4 1983009808
        %v1298 = vunpack.c.0.s8 %v1297
        %v1299 = vperm.slane %v1295, %v1298
        %v1300 = vrot.slane %v1216, 4
        %v1301 = vsel %vm906, %v1300, %v1214
        %v1303 = vunpack.c.l.s4 1983009808
        %v1304 = vunpack.c.0.s8 %v1303
        %v1305 = vperm.slane %v1301, %v1304
        %v1306 = vrot.slane %v1305, 4
        %v1307 = vsel %vm906, %v1306, %v1299
        %v1309 = vunpack.c.l.s4 1934713408
        %v1310 = vunpack.c.0.s8 %v1309
        %v1311 = vperm.slane %v1307, %v1310
        %v1312 = vrot.slane %v1311, 4
        %v1313 = vsel %vm906, 0, %v1312
        %v1314 = vsel %vm906, %v1241, %v1234
        %v1316 = vunpack.c.l.s4 1983009808
        %v1317 = vunpack.c.0.s8 %v1316
        %v1318 = vperm.slane %v1314, %v1317
        %v1319 = vrot.slane %v1242, 4
        %v1320 = vsel %vm906, %v1319, %v1240
        %v1322 = vunpack.c.l.s4 1983009808
        %v1323 = vunpack.c.0.s8 %v1322
        %v1324 = vperm.slane %v1320, %v1323
        %v1325 = vrot.slane %v1324, 4
        %v1326 = vsel %vm906, %v1325, %v1318
        %v1328 = vunpack.c.l.s4 1934713408
        %v1329 = vunpack.c.0.s8 %v1328
        %v1330 = vperm.slane %v1326, %v1329
        %v1331 = vrot.slane %v1330, 4
        %v1332 = vsel %vm906, 0, %v1331
        %v1333 = vsel %vm906, %v1267, %v1260
        %v1335 = vunpack.c.l.s4 1983009808
        %v1336 = vunpack.c.0.s8 %v1335
        %v1337 = vperm.slane %v1333, %v1336
        %v1338 = vrot.slane %v1268, 4
        %v1339 = vsel %vm906, %v1338, %v1266
        %v1341 = vunpack.c.l.s4 1983009808
        %v1342 = vunpack.c.0.s8 %v1341
        %v1343 = vperm.slane %v1339, %v1342
        %v1344 = vrot.slane %v1343, 4
        %v1345 = vsel %vm906, %v1344, %v1337
        %v1347 = vunpack.c.l.s4 1934713408
        %v1348 = vunpack.c.0.s8 %v1347
        %v1349 = vperm.slane %v1345, %v1348
        %v1350 = vrot.slane %v1349, 4
        %v1351 = vsel %vm906, 0, %v1350
        %v1352 = vsel %vm906, %v1293, %v1286
        %v1354 = vunpack.c.l.s4 1983009808
        %v1355 = vunpack.c.0.s8 %v1354
        %v1356 = vperm.slane %v1352, %v1355
        %v1357 = vrot.slane %v1294, 4
        %v1358 = vsel %vm906, %v1357, %v1292
        %v1360 = vunpack.c.l.s4 1983009808
        %v1361 = vunpack.c.0.s8 %v1360
        %v1362 = vperm.slane %v1358, %v1361
        %v1363 = vrot.slane %v1362, 4
        %v1364 = vsel %vm906, %v1363, %v1356
        %v1366 = vunpack.c.l.s4 1934713408
        %v1367 = vunpack.c.0.s8 %v1366
        %v1368 = vperm.slane %v1364, %v1367
        %v1369 = vrot.slane %v1368, 4
        %v1370 = vsel %vm906, 0, %v1369
        %v1373 = vpack.i.b16 %v1330, %v1311
        %v1375 = vshrl.u32 %v1311, 16
        %v1376 = vshrl.u32 %v1330, 16
        %v1377 = vpack.i.b16 %v1376, %v1375
        %v1381 = vpack.i.b16 %v1332, %v1313
        %v1383 = vshrl.u32 %v1313, 16
        %v1384 = vshrl.u32 %v1332, 16
        %v1385 = vpack.i.b16 %v1384, %v1383
        %v1389 = vpack.i.b16 %v1368, %v1349
        %v1391 = vshrl.u32 %v1349, 16
        %v1392 = vshrl.u32 %v1368, 16
        %v1393 = vpack.i.b16 %v1392, %v1391
        %v1397 = vpack.i.b16 %v1370, %v1351
        %v1399 = vshrl.u32 %v1351, 16
        %v1400 = vshrl.u32 %v1370, 16
        %v1401 = vpack.i.b16 %v1400, %v1399
        %1403 = vst.msk [vmem:[#allocation3] sm:$0xf] %vm1108, %v1373
        %1404 = vst.msk [vmem:[#allocation3 + $0x4] sm:$0xf] %vm1108, %v1389
        %1405 = vst.msk [vmem:[#allocation3 + $0x8] sm:$0xf] %vm1108, %v1377
        %1406 = vst.msk [vmem:[#allocation3 + $0xc] sm:$0xf] %vm1108, %v1393
        %1407 = vst.msk [vmem:[#allocation3 + $0x10] sm:$0xf] %vm1108, %v1381
        %1408 = vst.msk [vmem:[#allocation3 + $0x14] sm:$0xf] %vm1108, %v1397
        %1409 = vst.msk [vmem:[#allocation3 + $0x18] sm:$0xf] %vm1108, %v1385
        %1410 = vst.msk [vmem:[#allocation3 + $0x1c] sm:$0xf] %vm1108, %v1401
        %v1411 = vld [vmem:[#allocation11] sm:$0xf]
        %v1412 = vld [vmem:[#allocation11 + $0x4] sm:$0xf]
        %v1413 = vld [vmem:[#allocation11 + $0x8] sm:$0xf]
        %v1414 = vld [vmem:[#allocation11 + $0xc] sm:$0xf]
        %v1415 = vld [vmem:[%s9] sm:$0x1]
        %v1417 = vperm.slane %v1415, 0
        %v1423 = vunpack.c.l.b16 %v1411
        %v1424 = vunpack.c.l.b16 %v1412
        %v1425 = vunpack.c.l.b16 %v1413
        %v1426 = vunpack.c.l.b16 %v1414
        %v1427 = vpack.c.b16 %v1424, %v1423
        %v1428 = vpack.c.b16 %v1426, %v1425
        %1431 = vmatpush.bf16.msra.mxu0 0
        %1432 = vmatpush.bf16.msra.mxu0 0
        %1433 = vmatpush.bf16.msra.mxu0 0
        %1434 = vmatpush.bf16.msra.mxu0 0
        %1435 = vmatpush.bf16.msra.mxu0 0
        %1436 = vmatpush.bf16.msra.mxu0 0
        %1437 = vmatpush.bf16.msra.mxu0 %v1428
        %1438 = vmatpush.bf16.msra.mxu0 %v1427
        %1439 = vmatmul.bf16.gmra.mxu0 %v839
        %v1440 = vpop.f32.mrf.mxu0
        %v1441 = vadd.f32 %v1417, %v1440
        %v1442 = vpop.f32.mrf.mxu0
        %v1443 = vadd.f32 %v1417, %v1442
        %1444 = vdwg.mxu0
        %v1445 = vpack.c.bf16 %v1441, %v1441
        %v1446 = vpack.c.bf16 %v1443, %v1443
        %1449 = vrot.lane.b32.xlu0 %v1445, 120
        %v1450 = vpop.permute.xlu0 %1449
        %1451 = vrot.lane.b32.xlu0 %v1446, 120
        %v1452 = vpop.permute.xlu0 %1451
        %1453 = vrot.lane.b32.xlu0 %v1445, 112
        %v1454 = vpop.permute.xlu0 %1453
        %1455 = vrot.lane.b32.xlu0 %v1446, 112
        %v1456 = vpop.permute.xlu0 %1455
        %1457 = vrot.lane.b32.xlu0 %v1445, 104
        %v1458 = vpop.permute.xlu0 %1457
        %1459 = vrot.lane.b32.xlu0 %v1446, 104
        %v1460 = vpop.permute.xlu0 %1459
        %v1463 = vpack.i.b16 %v1450, %v1445
        %v1464 = vshrl.u32 %v1445, 16
        %v1465 = vshrl.u32 %v1450, 16
        %v1466 = vpack.i.b16 %v1465, %v1464
        %v1469 = vpack.i.b16 %v1458, %v1454
        %v1470 = vshrl.u32 %v1454, 16
        %v1471 = vshrl.u32 %v1458, 16
        %v1472 = vpack.i.b16 %v1471, %v1470
        %v1475 = vpack.i.b16 %v1452, %v1446
        %v1476 = vshrl.u32 %v1446, 16
        %v1477 = vshrl.u32 %v1452, 16
        %v1478 = vpack.i.b16 %v1477, %v1476
        %v1481 = vpack.i.b16 %v1460, %v1456
        %v1482 = vshrl.u32 %v1456, 16
        %v1483 = vshrl.u32 %v1460, 16
        %v1484 = vpack.i.b16 %v1483, %v1482
        %v1487 = vunpack.c.l.s4 1983009808
        %v1488 = vunpack.c.0.s8 %v1487
        %v1489 = vperm.slane %v1463, %v1488
        %v1492 = vunpack.c.l.s4 1983009808
        %v1493 = vunpack.c.0.s8 %v1492
        %v1494 = vperm.slane %v1469, %v1493
        %v1495 = vrot.slane %v1494, 4
        %v1496 = vsel %vm906, %v1495, %v1489
        %v1497 = vrot.slane %v1489, 4
        %v1498 = vsel %vm906, %v1494, %v1497
        %v1500 = vunpack.c.l.s4 1934713408
        %v1501 = vunpack.c.0.s8 %v1500
        %v1502 = vperm.slane %v1496, %v1501
        %v1504 = vunpack.c.l.s4 1934713408
        %v1505 = vunpack.c.0.s8 %v1504
        %v1506 = vperm.slane %v1498, %v1505
        %v1507 = vrot.slane %v1502, 4
        %v1508 = vsel %vm906, 0, %v1507
        %v1509 = vrot.slane %v1506, 4
        %v1510 = vsel %vm906, 0, %v1509
        %v1513 = vunpack.c.l.s4 1983009808
        %v1514 = vunpack.c.0.s8 %v1513
        %v1515 = vperm.slane %v1466, %v1514
        %v1518 = vunpack.c.l.s4 1983009808
        %v1519 = vunpack.c.0.s8 %v1518
        %v1520 = vperm.slane %v1472, %v1519
        %v1521 = vrot.slane %v1520, 4
        %v1522 = vsel %vm906, %v1521, %v1515
        %v1523 = vrot.slane %v1515, 4
        %v1524 = vsel %vm906, %v1520, %v1523
        %v1526 = vunpack.c.l.s4 1934713408
        %v1527 = vunpack.c.0.s8 %v1526
        %v1528 = vperm.slane %v1522, %v1527
        %v1530 = vunpack.c.l.s4 1934713408
        %v1531 = vunpack.c.0.s8 %v1530
        %v1532 = vperm.slane %v1524, %v1531
        %v1533 = vrot.slane %v1528, 4
        %v1534 = vsel %vm906, 0, %v1533
        %v1535 = vrot.slane %v1532, 4
        %v1536 = vsel %vm906, 0, %v1535
        %v1539 = vunpack.c.l.s4 1983009808
        %v1540 = vunpack.c.0.s8 %v1539
        %v1541 = vperm.slane %v1475, %v1540
        %v1544 = vunpack.c.l.s4 1983009808
        %v1545 = vunpack.c.0.s8 %v1544
        %v1546 = vperm.slane %v1481, %v1545
        %v1547 = vrot.slane %v1546, 4
        %v1548 = vsel %vm906, %v1547, %v1541
        %v1549 = vrot.slane %v1541, 4
        %v1550 = vsel %vm906, %v1546, %v1549
        %v1552 = vunpack.c.l.s4 1934713408
        %v1553 = vunpack.c.0.s8 %v1552
        %v1554 = vperm.slane %v1548, %v1553
        %v1556 = vunpack.c.l.s4 1934713408
        %v1557 = vunpack.c.0.s8 %v1556
        %v1558 = vperm.slane %v1550, %v1557
        %v1559 = vrot.slane %v1554, 4
        %v1560 = vsel %vm906, 0, %v1559
        %v1561 = vrot.slane %v1558, 4
        %v1562 = vsel %vm906, 0, %v1561
        %v1565 = vunpack.c.l.s4 1983009808
        %v1566 = vunpack.c.0.s8 %v1565
        %v1567 = vperm.slane %v1478, %v1566
        %v1570 = vunpack.c.l.s4 1983009808
        %v1571 = vunpack.c.0.s8 %v1570
        %v1572 = vperm.slane %v1484, %v1571
        %v1573 = vrot.slane %v1572, 4
        %v1574 = vsel %vm906, %v1573, %v1567
        %v1575 = vrot.slane %v1567, 4
        %v1576 = vsel %vm906, %v1572, %v1575
        %v1578 = vunpack.c.l.s4 1934713408
        %v1579 = vunpack.c.0.s8 %v1578
        %v1580 = vperm.slane %v1574, %v1579
        %v1582 = vunpack.c.l.s4 1934713408
        %v1583 = vunpack.c.0.s8 %v1582
        %v1584 = vperm.slane %v1576, %v1583
        %v1585 = vrot.slane %v1580, 4
        %v1586 = vsel %vm906, 0, %v1585
        %v1587 = vrot.slane %v1584, 4
        %v1588 = vsel %vm906, 0, %v1587
        %v1589 = vsel %vm906, %v1509, %v1502
        %v1591 = vunpack.c.l.s4 1983009808
        %v1592 = vunpack.c.0.s8 %v1591
        %v1593 = vperm.slane %v1589, %v1592
        %v1594 = vrot.slane %v1510, 4
        %v1595 = vsel %vm906, %v1594, %v1508
        %v1597 = vunpack.c.l.s4 1983009808
        %v1598 = vunpack.c.0.s8 %v1597
        %v1599 = vperm.slane %v1595, %v1598
        %v1600 = vrot.slane %v1599, 4
        %v1601 = vsel %vm906, %v1600, %v1593
        %v1603 = vunpack.c.l.s4 1934713408
        %v1604 = vunpack.c.0.s8 %v1603
        %v1605 = vperm.slane %v1601, %v1604
        %v1606 = vrot.slane %v1605, 4
        %v1607 = vsel %vm906, 0, %v1606
        %v1608 = vsel %vm906, %v1535, %v1528
        %v1610 = vunpack.c.l.s4 1983009808
        %v1611 = vunpack.c.0.s8 %v1610
        %v1612 = vperm.slane %v1608, %v1611
        %v1613 = vrot.slane %v1536, 4
        %v1614 = vsel %vm906, %v1613, %v1534
        %v1616 = vunpack.c.l.s4 1983009808
        %v1617 = vunpack.c.0.s8 %v1616
        %v1618 = vperm.slane %v1614, %v1617
        %v1619 = vrot.slane %v1618, 4
        %v1620 = vsel %vm906, %v1619, %v1612
        %v1622 = vunpack.c.l.s4 1934713408
        %v1623 = vunpack.c.0.s8 %v1622
        %v1624 = vperm.slane %v1620, %v1623
        %v1625 = vrot.slane %v1624, 4
        %v1626 = vsel %vm906, 0, %v1625
        %v1627 = vsel %vm906, %v1561, %v1554
        %v1629 = vunpack.c.l.s4 1983009808
        %v1630 = vunpack.c.0.s8 %v1629
        %v1631 = vperm.slane %v1627, %v1630
        %v1632 = vrot.slane %v1562, 4
        %v1633 = vsel %vm906, %v1632, %v1560
        %v1635 = vunpack.c.l.s4 1983009808
        %v1636 = vunpack.c.0.s8 %v1635
        %v1637 = vperm.slane %v1633, %v1636
        %v1638 = vrot.slane %v1637, 4
        %v1639 = vsel %vm906, %v1638, %v1631
        %v1641 = vunpack.c.l.s4 1934713408
        %v1642 = vunpack.c.0.s8 %v1641
        %v1643 = vperm.slane %v1639, %v1642
        %v1644 = vrot.slane %v1643, 4
        %v1645 = vsel %vm906, 0, %v1644
        %v1646 = vsel %vm906, %v1587, %v1580
        %v1648 = vunpack.c.l.s4 1983009808
        %v1649 = vunpack.c.0.s8 %v1648
        %v1650 = vperm.slane %v1646, %v1649
        %v1651 = vrot.slane %v1588, 4
        %v1652 = vsel %vm906, %v1651, %v1586
        %v1654 = vunpack.c.l.s4 1983009808
        %v1655 = vunpack.c.0.s8 %v1654
        %v1656 = vperm.slane %v1652, %v1655
        %v1657 = vrot.slane %v1656, 4
        %v1658 = vsel %vm906, %v1657, %v1650
        %v1660 = vunpack.c.l.s4 1934713408
        %v1661 = vunpack.c.0.s8 %v1660
        %v1662 = vperm.slane %v1658, %v1661
        %v1663 = vrot.slane %v1662, 4
        %v1664 = vsel %vm906, 0, %v1663
        %v1667 = vpack.i.b16 %v1624, %v1605
        %v1669 = vshrl.u32 %v1605, 16
        %v1670 = vshrl.u32 %v1624, 16
        %v1671 = vpack.i.b16 %v1670, %v1669
        %v1675 = vpack.i.b16 %v1626, %v1607
        %v1677 = vshrl.u32 %v1607, 16
        %v1678 = vshrl.u32 %v1626, 16
        %v1679 = vpack.i.b16 %v1678, %v1677
        %v1683 = vpack.i.b16 %v1662, %v1643
        %v1685 = vshrl.u32 %v1643, 16
        %v1686 = vshrl.u32 %v1662, 16
        %v1687 = vpack.i.b16 %v1686, %v1685
        %v1691 = vpack.i.b16 %v1664, %v1645
        %v1693 = vshrl.u32 %v1645, 16
        %v1694 = vshrl.u32 %v1664, 16
        %v1695 = vpack.i.b16 %v1694, %v1693
        %1697 = vst.msk [vmem:[#allocation4] sm:$0xf] %vm1108, %v1667
        %1698 = vst.msk [vmem:[#allocation4 + $0x4] sm:$0xf] %vm1108, %v1683
        %1699 = vst.msk [vmem:[#allocation4 + $0x8] sm:$0xf] %vm1108, %v1671
        %1700 = vst.msk [vmem:[#allocation4 + $0xc] sm:$0xf] %vm1108, %v1687
        %1701 = vst.msk [vmem:[#allocation4 + $0x10] sm:$0xf] %vm1108, %v1675
        %1702 = vst.msk [vmem:[#allocation4 + $0x14] sm:$0xf] %vm1108, %v1691
        %1703 = vst.msk [vmem:[#allocation4 + $0x18] sm:$0xf] %vm1108, %v1679
        %1704 = vst.msk [vmem:[#allocation4 + $0x1c] sm:$0xf] %vm1108, %v1695
        loop: start=0, step=1, limit=4
        $region125: #{transformer_encoder.1} parent=91 // loop_pre_header
          _
        $region126: #{transformer_encoder.1} parent=91 // loop_header
          %s1706 = sphi 0, %s1710
          %p1707 = scmp.ge.s32.totalorder %s1706, 4
        $region127: #{transformer_encoder.1} parent=91 // loop_header_branch
          %1709 = sbr.rel (%p1707) target = $region131
        $region128: #{transformer_encoder.1} parent=91 // loop_body
          %s1711 = smul.u32 %s1706, 2
          %s1712 = smul.addr %s1711, 4
          %s1713 = scalar_lea.vmem [#allocation2], %s1712
          %v1714 = vld [vmem:[%s1713] sm:$0xf]
          %v1715 = vld [vmem:[%s1713 + $0x4] sm:$0xf]
          %s1716 = smul.addr %s1711, 4
          %s1717 = scalar_lea.vmem [#allocation3], %s1716
          %v1718 = vld [vmem:[%s1717] sm:$0xf]
          %v1719 = vld [vmem:[%s1717 + $0x4] sm:$0xf]
          %s1720 = smul.addr %s1711, 4
          %s1721 = scalar_lea.vmem [#allocation4], %s1720
          %v1722 = vld [vmem:[%s1721] sm:$0xf]
          %v1723 = vld [vmem:[%s1721 + $0x4] sm:$0xf]
          %v1726 = vunpack.c.l.b16 %v1714
          %v1727 = vunpack.c.l.b16 %v1715
          %v1728 = vpack.c.b16 %v1727, %v1726
          %v1731 = vunpack.c.l.b16 %v1718
          %v1732 = vunpack.c.l.b16 %v1719
          %v1733 = vpack.c.b16 %v1732, %v1731
          %vm1734 = vcmask 64512
          %v1736 = vsel %vm1734, %v1728, 0
          %v1739 = vsel %vm1734, %v1733, 0
          %1741 = vmatpush.bf16.xpose.msra.mxu0 0
          %1742 = vmatpush.bf16.xpose.msra.mxu0 0
          %1743 = vmatpush.bf16.xpose.msra.mxu0 0
          %1744 = vmatpush.bf16.xpose.msra.mxu0 0
          %1745 = vmatpush.bf16.xpose.msra.mxu0 0
          %1746 = vmatpush.bf16.xpose.msra.mxu0 0
          %1747 = vmatpush.bf16.xpose.msra.mxu0 0
          %1748 = vmatpush.bf16.xpose.msra.mxu0 %v1739
          %1749 = vmatmul.bf16.gmra.mxu0 %v1736
          %v1750 = vpop.f32.mrf.mxu0
          %v1751 = vadd.f32 0.0, %v1750
          %v1752 = vpop.f32.mrf.mxu0
          %v1753 = vadd.f32 0.0, %v1752
          %1754 = vdwg.mxu0
          %vm1755 = vcmask 130048
          %v1756 = vsel %vm1755, %v1751, -inf
          %1757 = vmax.xlane.f32.xlu0 %v1756
          %v1758 = vpop.xlane.xlu0 %1757
          %v1759 = vsel %vm1755, %v1753, -inf
          %1760 = vmax.xlane.f32.xlu0 %v1759
          %v1761 = vpop.xlane.xlu0 %1760
          %v1762 = vsub.f32 %v1751, %v1758
          %v1763 = vsub.f32 %v1753, %v1761
          %v1764 = vmul.f32 %v1762, 1.442695
          %v1765 = vpow.pop %v1764
          %v1766 = vmul.f32 %v1763, 1.442695
          %v1767 = vpow.pop %v1766
          %v1768 = vsel %vm1755, %v1765, 0.0
          %1769 = vadd.xlane.f32.xlu0 %v1768
          %v1770 = vpop.xlane.xlu0 %1769
          %v1771 = vsel %vm1755, %v1767, 0.0
          %1772 = vadd.xlane.f32.xlu0 %v1771
          %v1773 = vpop.xlane.xlu0 %1772
          %v1774 = vrcp.pop %v1770
          %v1775 = vrcp.pop %v1773
          %v1776 = vmul.f32 %v1765, %v1774
          %v1777 = vmul.f32 %v1767, %v1775
          %v1778 = vpack.c.bf16 %v1777, %v1776
          %v1781 = vunpack.c.l.b16 %v1722
          %v1782 = vunpack.c.l.b16 %v1723
          %v1783 = vpack.c.b16 %v1782, %v1781
          %v1786 = vsel %vm1755, %v1778, 0
          %1788 = vmatpush.bf16.msra.mxu0 0
          %1789 = vmatpush.bf16.msra.mxu0 0
          %1790 = vmatpush.bf16.msra.mxu0 0
          %1791 = vmatpush.bf16.msra.mxu0 0
          %1792 = vmatpush.bf16.msra.mxu0 0
          %1793 = vmatpush.bf16.msra.mxu0 0
          %1794 = vmatpush.bf16.msra.mxu0 0
          %1795 = vmatpush.bf16.msra.mxu0 %v1783
          %1796 = vmatmul.bf16.gmra.mxu0 %v1786
          %v1797 = vpop.f32.mrf.mxu0
          %v1798 = vadd.f32 0.0, %v1797
          %v1799 = vpop.f32.mrf.mxu0
          %v1800 = vadd.f32 0.0, %v1799
          %1801 = vdwg.mxu0
          %v1802 = vpack.c.bf16 %v1798, %v1798
          %v1803 = vpack.c.bf16 %v1800, %v1800
          %s1804 = smul.addr %s1711, 4
          %s1805 = scalar_lea.vmem [#allocation5], %s1804
          %1806 = vst.msk [vmem:[%s1805] sm:$0xf] %vm1108, %v1802
          %1807 = vst.msk [vmem:[%s1805 + $0x4] sm:$0xf] %vm1108, %v1803
        $region129: #{transformer_encoder.1} parent=91 // loop_footer
          %s1710 = sadd.s32 1, %s1706
        $region130: #{transformer_encoder.1} parent=91 // loop_footer_branch
          %1705 = sbr.rel target = $region126
        $region131: #{transformer_encoder.1} parent=91 // loop_exit
          _
        %v1808 = vld [vmem:[#allocation5] sm:$0xf]
        %v1809 = vld [vmem:[#allocation5 + $0x4] sm:$0xf]
        %v1810 = vld [vmem:[#allocation5 + $0x8] sm:$0xf]
        %v1811 = vld [vmem:[#allocation5 + $0xc] sm:$0xf]
        %v1812 = vld [vmem:[#allocation5 + $0x10] sm:$0xf]
        %v1813 = vld [vmem:[#allocation5 + $0x14] sm:$0xf]
        %v1814 = vld [vmem:[#allocation5 + $0x18] sm:$0xf]
        %v1815 = vld [vmem:[#allocation5 + $0x1c] sm:$0xf]
        %v1818 = vpack.i.b16 %v1810, %v1808
        %v1819 = vshrl.u32 %v1808, 16
        %v1820 = vshrl.u32 %v1810, 16
        %v1821 = vpack.i.b16 %v1820, %v1819
        %v1824 = vpack.i.b16 %v1814, %v1812
        %v1825 = vshrl.u32 %v1812, 16
        %v1826 = vshrl.u32 %v1814, 16
        %v1827 = vpack.i.b16 %v1826, %v1825
        %v1830 = vpack.i.b16 %v1811, %v1809
        %v1831 = vshrl.u32 %v1809, 16
        %v1832 = vshrl.u32 %v1811, 16
        %v1833 = vpack.i.b16 %v1832, %v1831
        %v1836 = vpack.i.b16 %v1815, %v1813
        %v1837 = vshrl.u32 %v1813, 16
        %v1838 = vshrl.u32 %v1815, 16
        %v1839 = vpack.i.b16 %v1838, %v1837
        %v1842 = vunpack.c.l.s4 1983009808
        %v1843 = vunpack.c.0.s8 %v1842
        %v1844 = vperm.slane %v1818, %v1843
        %v1847 = vunpack.c.l.s4 1983009808
        %v1848 = vunpack.c.0.s8 %v1847
        %v1849 = vperm.slane %v1824, %v1848
        %v1850 = vrot.slane %v1849, 4
        %v1851 = vsel %vm906, %v1850, %v1844
        %v1852 = vrot.slane %v1844, 4
        %v1853 = vsel %vm906, %v1849, %v1852
        %v1855 = vunpack.c.l.s4 1934713408
        %v1856 = vunpack.c.0.s8 %v1855
        %v1857 = vperm.slane %v1851, %v1856
        %v1859 = vunpack.c.l.s4 1934713408
        %v1860 = vunpack.c.0.s8 %v1859
        %v1861 = vperm.slane %v1853, %v1860
        %v1862 = vrot.slane %v1857, 4
        %v1863 = vsel %vm906, 0, %v1862
        %v1864 = vrot.slane %v1861, 4
        %v1865 = vsel %vm906, 0, %v1864
        %v1868 = vunpack.c.l.s4 1983009808
        %v1869 = vunpack.c.0.s8 %v1868
        %v1870 = vperm.slane %v1821, %v1869
        %v1873 = vunpack.c.l.s4 1983009808
        %v1874 = vunpack.c.0.s8 %v1873
        %v1875 = vperm.slane %v1827, %v1874
        %v1876 = vrot.slane %v1875, 4
        %v1877 = vsel %vm906, %v1876, %v1870
        %v1878 = vrot.slane %v1870, 4
        %v1879 = vsel %vm906, %v1875, %v1878
        %v1881 = vunpack.c.l.s4 1934713408
        %v1882 = vunpack.c.0.s8 %v1881
        %v1883 = vperm.slane %v1877, %v1882
        %v1885 = vunpack.c.l.s4 1934713408
        %v1886 = vunpack.c.0.s8 %v1885
        %v1887 = vperm.slane %v1879, %v1886
        %v1888 = vrot.slane %v1883, 4
        %v1889 = vsel %vm906, 0, %v1888
        %v1890 = vrot.slane %v1887, 4
        %v1891 = vsel %vm906, 0, %v1890
        %v1894 = vunpack.c.l.s4 1983009808
        %v1895 = vunpack.c.0.s8 %v1894
        %v1896 = vperm.slane %v1830, %v1895
        %v1899 = vunpack.c.l.s4 1983009808
        %v1900 = vunpack.c.0.s8 %v1899
        %v1901 = vperm.slane %v1836, %v1900
        %v1902 = vrot.slane %v1901, 4
        %v1903 = vsel %vm906, %v1902, %v1896
        %v1904 = vrot.slane %v1896, 4
        %v1905 = vsel %vm906, %v1901, %v1904
        %v1907 = vunpack.c.l.s4 1934713408
        %v1908 = vunpack.c.0.s8 %v1907
        %v1909 = vperm.slane %v1903, %v1908
        %v1911 = vunpack.c.l.s4 1934713408
        %v1912 = vunpack.c.0.s8 %v1911
        %v1913 = vperm.slane %v1905, %v1912
        %v1914 = vrot.slane %v1909, 4
        %v1915 = vsel %vm906, 0, %v1914
        %v1916 = vrot.slane %v1913, 4
        %v1917 = vsel %vm906, 0, %v1916
        %v1920 = vunpack.c.l.s4 1983009808
        %v1921 = vunpack.c.0.s8 %v1920
        %v1922 = vperm.slane %v1833, %v1921
        %v1925 = vunpack.c.l.s4 1983009808
        %v1926 = vunpack.c.0.s8 %v1925
        %v1927 = vperm.slane %v1839, %v1926
        %v1928 = vrot.slane %v1927, 4
        %v1929 = vsel %vm906, %v1928, %v1922
        %v1930 = vrot.slane %v1922, 4
        %v1931 = vsel %vm906, %v1927, %v1930
        %v1933 = vunpack.c.l.s4 1934713408
        %v1934 = vunpack.c.0.s8 %v1933
        %v1935 = vperm.slane %v1929, %v1934
        %v1937 = vunpack.c.l.s4 1934713408
        %v1938 = vunpack.c.0.s8 %v1937
        %v1939 = vperm.slane %v1931, %v1938
        %v1940 = vrot.slane %v1935, 4
        %v1941 = vsel %vm906, 0, %v1940
        %v1942 = vrot.slane %v1939, 4
        %v1943 = vsel %vm906, 0, %v1942
        %v1944 = vsel %vm906, %v1864, %v1857
        %v1946 = vunpack.c.l.s4 1983009808
        %v1947 = vunpack.c.0.s8 %v1946
        %v1948 = vperm.slane %v1944, %v1947
        %v1949 = vrot.slane %v1865, 4
        %v1950 = vsel %vm906, %v1949, %v1863
        %v1952 = vunpack.c.l.s4 1983009808
        %v1953 = vunpack.c.0.s8 %v1952
        %v1954 = vperm.slane %v1950, %v1953
        %v1955 = vrot.slane %v1954, 4
        %v1956 = vsel %vm906, %v1955, %v1948
        %v1958 = vunpack.c.l.s4 1934713408
        %v1959 = vunpack.c.0.s8 %v1958
        %v1960 = vperm.slane %v1956, %v1959
        %v1961 = vrot.slane %v1960, 4
        %v1962 = vsel %vm906, 0, %v1961
        %v1963 = vsel %vm906, %v1890, %v1883
        %v1965 = vunpack.c.l.s4 1983009808
        %v1966 = vunpack.c.0.s8 %v1965
        %v1967 = vperm.slane %v1963, %v1966
        %v1968 = vrot.slane %v1891, 4
        %v1969 = vsel %vm906, %v1968, %v1889
        %v1971 = vunpack.c.l.s4 1983009808
        %v1972 = vunpack.c.0.s8 %v1971
        %v1973 = vperm.slane %v1969, %v1972
        %v1974 = vrot.slane %v1973, 4
        %v1975 = vsel %vm906, %v1974, %v1967
        %v1977 = vunpack.c.l.s4 1934713408
        %v1978 = vunpack.c.0.s8 %v1977
        %v1979 = vperm.slane %v1975, %v1978
        %v1980 = vrot.slane %v1979, 4
        %v1981 = vsel %vm906, 0, %v1980
        %v1982 = vsel %vm906, %v1916, %v1909
        %v1984 = vunpack.c.l.s4 1983009808
        %v1985 = vunpack.c.0.s8 %v1984
        %v1986 = vperm.slane %v1982, %v1985
        %v1987 = vrot.slane %v1917, 4
        %v1988 = vsel %vm906, %v1987, %v1915
        %v1990 = vunpack.c.l.s4 1983009808
        %v1991 = vunpack.c.0.s8 %v1990
        %v1992 = vperm.slane %v1988, %v1991
        %v1993 = vrot.slane %v1992, 4
        %v1994 = vsel %vm906, %v1993, %v1986
        %v1996 = vunpack.c.l.s4 1934713408
        %v1997 = vunpack.c.0.s8 %v1996
        %v1998 = vperm.slane %v1994, %v1997
        %v1999 = vrot.slane %v1998, 4
        %v2000 = vsel %vm906, 0, %v1999
        %v2001 = vsel %vm906, %v1942, %v1935
        %v2003 = vunpack.c.l.s4 1983009808
        %v2004 = vunpack.c.0.s8 %v2003
        %v2005 = vperm.slane %v2001, %v2004
        %v2006 = vrot.slane %v1943, 4
        %v2007 = vsel %vm906, %v2006, %v1941
        %v2009 = vunpack.c.l.s4 1983009808
        %v2010 = vunpack.c.0.s8 %v2009
        %v2011 = vperm.slane %v2007, %v2010
        %v2012 = vrot.slane %v2011, 4
        %v2013 = vsel %vm906, %v2012, %v2005
        %v2015 = vunpack.c.l.s4 1934713408
        %v2016 = vunpack.c.0.s8 %v2015
        %v2017 = vperm.slane %v2013, %v2016
        %v2018 = vrot.slane %v2017, 4
        %v2019 = vsel %vm906, 0, %v2018
        %v2022 = vpack.i.b16 %v1979, %v1960
        %v2023 = vshrl.u32 %v1960, 16
        %v2024 = vshrl.u32 %v1979, 16
        %v2025 = vpack.i.b16 %v2024, %v2023
        %v2028 = vpack.i.b16 %v1981, %v1962
        %v2029 = vshrl.u32 %v1962, 16
        %v2030 = vshrl.u32 %v1981, 16
        %v2031 = vpack.i.b16 %v2030, %v2029
        %v2034 = vpack.i.b16 %v2017, %v1998
        %v2035 = vshrl.u32 %v1998, 16
        %v2036 = vshrl.u32 %v2017, 16
        %v2037 = vpack.i.b16 %v2036, %v2035
        %v2040 = vpack.i.b16 %v2019, %v2000
        %v2041 = vshrl.u32 %v2000, 16
        %v2042 = vshrl.u32 %v2019, 16
        %v2043 = vpack.i.b16 %v2042, %v2041
        %v2044 = vunpack.c.l.b16 %v2022
        %v2045 = vunpack.c.l.b16 %v2034
        %v2046 = vpack.c.b16 %v2045, %v2044
        %v2047 = vunpack.c.l.b16 %v2025
        %v2048 = vunpack.c.l.b16 %v2037
        %v2049 = vpack.c.b16 %v2048, %v2047
        %2050 = vrot.lane.b32.xlu0 %v2049, 8
        %v2051 = vpop.permute.xlu0 %2050
        %v2052 = vunpack.c.l.b16 %v2028
        %v2053 = vunpack.c.l.b16 %v2040
        %v2054 = vpack.c.b16 %v2053, %v2052
        %2055 = vrot.lane.b32.xlu0 %v2054, 16
        %v2056 = vpop.permute.xlu0 %2055
        %v2057 = vunpack.c.l.b16 %v2031
        %v2058 = vunpack.c.l.b16 %v2043
        %v2059 = vpack.c.b16 %v2058, %v2057
        %2060 = vrot.lane.b32.xlu0 %v2059, 24
        %v2061 = vpop.permute.xlu0 %2060
        %vm2062 = vcmask 64512
        %v2065 = vsel %vm2062, %v2046, %v2051
        %vm2066 = vcmask 130048
        %v2068 = vsel %vm2066, %v2065, %v2056
        %vm2069 = vcmask 195584
        %v2071 = vsel %vm2069, %v2068, %v2061
        %v2072 = vld [vmem:[#allocation12] sm:$0xf]
        %v2073 = vld [vmem:[#allocation12 + $0x4] sm:$0xf]
        %v2074 = vld [vmem:[#allocation12 + $0x8] sm:$0xf]
        %v2075 = vld [vmem:[#allocation12 + $0xc] sm:$0xf]
        %v2076 = vld [vmem:[#allocation14] sm:$0x1]
        %v2078 = vperm.slane %v2076, 0
        %v2084 = vunpack.c.l.b16 %v2072
        %v2085 = vunpack.c.l.b16 %v2073
        %v2086 = vunpack.c.l.b16 %v2074
        %v2087 = vunpack.c.l.b16 %v2075
        %v2088 = vpack.c.b16 %v2085, %v2084
        %v2089 = vpack.c.b16 %v2087, %v2086
        %v2092 = vsel %vm753, %v2071, 0
        %2094 = vmatpush.bf16.msra.mxu0 0
        %2095 = vmatpush.bf16.msra.mxu0 0
        %2096 = vmatpush.bf16.msra.mxu0 0
        %2097 = vmatpush.bf16.msra.mxu0 0
        %2098 = vmatpush.bf16.msra.mxu0 0
        %2099 = vmatpush.bf16.msra.mxu0 0
        %2100 = vmatpush.bf16.msra.mxu0 %v2089
        %2101 = vmatpush.bf16.msra.mxu0 %v2088
        %2102 = vmatmul.bf16.gmra.mxu0 %v2092
        %v2103 = vpop.f32.mrf.mxu0
        %v2104 = vadd.f32 %v2078, %v2103
        %v2105 = vpop.f32.mrf.mxu0
        %v2106 = vadd.f32 %v2078, %v2105
        %2107 = vdwg.mxu0
        %v2108 = vadd.f32 %v751, %v2104
        %v2109 = vadd.f32 %v752, %v2106
        %v2110 = vsel %vm753, %v2108, 0.0
        %2111 = vadd.xlane.f32.xlu0 %v2110
        %v2112 = vpop.xlane.xlu0 %2111
        %v2113 = vsel %vm753, %v2109, 0.0
        %2114 = vadd.xlane.f32.xlu0 %v2113
        %v2115 = vpop.xlane.xlu0 %2114
        %v2116 = vmul.f32 %v2112, %v766
        %v2117 = vmul.f32 %v2115, %v766
        %v2118 = vsub.f32 %v2108, %v2116
        %v2119 = vsub.f32 %v2109, %v2117
        %v2120 = vmul.f32 %v2118, %v2118
        %v2121 = vmul.f32 %v2119, %v2119
        %v2122 = vsel %vm753, %v2120, 0.0
        %2123 = vadd.xlane.f32.xlu0 %v2122
        %v2124 = vpop.xlane.xlu0 %2123
        %v2125 = vsel %vm753, %v2121, 0.0
        %2126 = vadd.xlane.f32.xlu0 %v2125
        %v2127 = vpop.xlane.xlu0 %2126
        %v2128 = vmul.f32 %v2124, %v766
        %v2129 = vmul.f32 %v2127, %v766
        %v2130 = vadd.f32 %v2128, 1e-05
        %v2131 = vadd.f32 %v2129, 1e-05
        %v2132 = vrsqrt.pop %v2130
        %v2133 = vmul.f32 %v2132, %v2130
        %v2134 = vmul.f32 %v2133, %v2132
        %v2135 = vmul.f32 0.5, %v2134
        %v2136 = vsub.f32 1.5, %v2135
        %v2137 = vmul.f32 %v2132, %v2136
        %vm2138 = vweird.f32 %v2130
        %vm2139 = vweird.f32 %v2132
        %vm2140 = vmor %vm2138, %vm2139
        %v2141 = vsel %vm2140, %v2132, %v2137
        %v2142 = vrsqrt.pop %v2131
        %v2143 = vmul.f32 %v2142, %v2131
        %v2144 = vmul.f32 %v2143, %v2142
        %v2145 = vmul.f32 0.5, %v2144
        %v2146 = vsub.f32 1.5, %v2145
        %v2147 = vmul.f32 %v2142, %v2146
        %vm2148 = vweird.f32 %v2131
        %vm2149 = vweird.f32 %v2142
        %vm2150 = vmor %vm2148, %vm2149
        %v2151 = vsel %vm2150, %v2142, %v2147
        %v2152 = vmul.f32 %v2118, %v2141
        %v2153 = vmul.f32 %v2119, %v2151
        %v2154 = vld [vmem:[%s12] sm:$0x1]
        %v2156 = vperm.slane %v2154, 0
        %v2158 = vmul.f32 %v2152, %v2156
        %v2159 = vmul.f32 %v2153, %v2156
        %v2160 = vld [vmem:[%s13] sm:$0x1]
        %v2162 = vperm.slane %v2160, 0
        %v2164 = vadd.f32 %v2158, %v2162
        %v2165 = vadd.f32 %v2159, %v2162
        %v2166 = vpack.c.bf16 %v2165, %v2164
        %v2167 = vld [vmem:[#allocation15] sm:$0xf]
        %v2168 = vld [vmem:[#allocation15 + $0x4] sm:$0xf]
        %v2169 = vld [vmem:[#allocation15 + $0x8] sm:$0xf]
        %v2170 = vld [vmem:[#allocation15 + $0xc] sm:$0xf]
        %v2171 = vld [vmem:[#allocation17] sm:$0x1]
        %v2173 = vperm.slane %v2171, 0
        %v2179 = vunpack.c.l.b16 %v2167
        %v2180 = vunpack.c.l.b16 %v2168
        %v2181 = vunpack.c.l.b16 %v2169
        %v2182 = vunpack.c.l.b16 %v2170
        %v2183 = vpack.c.b16 %v2180, %v2179
        %v2184 = vpack.c.b16 %v2182, %v2181
        %v2188 = vsel %vm753, %v2166, 0
        %2190 = vmatpush.bf16.msra.mxu0 0
        %2191 = vmatpush.bf16.msra.mxu0 0
        %2192 = vmatpush.bf16.msra.mxu0 0
        %2193 = vmatpush.bf16.msra.mxu0 0
        %2194 = vmatpush.bf16.msra.mxu0 0
        %2195 = vmatpush.bf16.msra.mxu0 0
        %2196 = vmatpush.bf16.msra.mxu0 %v2184
        %2197 = vmatpush.bf16.msra.mxu0 %v2183
        %2198 = vmatmul.bf16.gmra.mxu0 %v2188
        %v2199 = vpop.f32.mrf.mxu0
        %v2200 = vadd.f32 %v2173, %v2199
        %v2201 = vpop.f32.mrf.mxu0
        %v2202 = vadd.f32 %v2173, %v2201
        %2203 = vdwg.mxu0
        %v2204 = vxor.u32 %v2200, 2147483648
        %v2205 = vxor.u32 %v2202, 2147483648
        %v2206 = vmul.f32 %v2204, 1.442695
        %v2207 = vpow.pop %v2206
        %v2208 = vmul.f32 %v2205, 1.442695
        %v2209 = vpow.pop %v2208
        %v2210 = vadd.f32 %v2207, 1.0
        %v2211 = vadd.f32 %v2209, 1.0
        %v2212 = vrcp.pop %v2210
        %v2213 = vmul.f32 %v2210, %v2212
        %v2214 = vsub.f32 1.0, %v2213
        %v2215 = vmul.f32 %v2212, %v2214
        %v2216 = vadd.f32 %v2212, %v2215
        %vm2217 = vweird.f32 %v2210
        %vm2218 = vweird.f32 %v2212
        %vm2219 = vmor %vm2217, %vm2218
        %v2220 = vsel %vm2219, %v2212, %v2216
        %v2221 = vand.u32 2147483647, %v2210
        %vm2222 = vcmp.eq.f32.partialorder %v2221, 8.507059e+37
        %v2223 = vand.u32 %v2210, 2147483648
        %v2224 = vor.u32 1.1754944e-38, %v2223
        %v2225 = vsel %vm2222, %v2224, %v2220
        %v2226 = vmul.f32 1.0, %v2225
        %v2227 = vrcp.pop %v2211
        %v2228 = vmul.f32 %v2211, %v2227
        %v2229 = vsub.f32 1.0, %v2228
        %v2230 = vmul.f32 %v2227, %v2229
        %v2231 = vadd.f32 %v2227, %v2230
        %vm2232 = vweird.f32 %v2211
        %vm2233 = vweird.f32 %v2227
        %vm2234 = vmor %vm2232, %vm2233
        %v2235 = vsel %vm2234, %v2227, %v2231
        %v2236 = vand.u32 2147483647, %v2211
        %vm2237 = vcmp.eq.f32.partialorder %v2236, 8.507059e+37
        %v2238 = vand.u32 %v2211, 2147483648
        %v2239 = vor.u32 1.1754944e-38, %v2238
        %v2240 = vsel %vm2237, %v2239, %v2235
        %v2241 = vmul.f32 1.0, %v2240
        %v2242 = vmul.f32 %v2200, %v2226
        %v2243 = vmul.f32 %v2202, %v2241
        %v2244 = vpack.c.bf16 %v2243, %v2242
        %v2245 = vld [vmem:[%s16] sm:$0xf]
        %v2246 = vld [vmem:[%s16 + $0x4] sm:$0xf]
        %v2247 = vld [vmem:[%s16 + $0x8] sm:$0xf]
        %v2248 = vld [vmem:[%s16 + $0xc] sm:$0xf]
        %v2249 = vld [vmem:[%s16 + $0x10] sm:$0xf]
        %v2250 = vld [vmem:[%s16 + $0x14] sm:$0xf]
        %v2251 = vld [vmem:[%s16 + $0x18] sm:$0xf]
        %v2252 = vld [vmem:[%s16 + $0x1c] sm:$0xf]
        %v2253 = vld [vmem:[#allocation18] sm:$0x1]
        %v2255 = vperm.slane %v2253, 0
        %v2265 = vunpack.c.l.b16 %v2245
        %v2266 = vunpack.c.l.b16 %v2246
        %v2267 = vunpack.c.l.b16 %v2247
        %v2268 = vunpack.c.l.b16 %v2248
        %v2269 = vunpack.c.l.b16 %v2249
        %v2270 = vunpack.c.l.b16 %v2250
        %v2271 = vunpack.c.l.b16 %v2251
        %v2272 = vunpack.c.l.b16 %v2252
        %v2273 = vpack.c.b16 %v2266, %v2265
        %v2274 = vpack.c.b16 %v2268, %v2267
        %v2275 = vpack.c.b16 %v2270, %v2269
        %v2276 = vpack.c.b16 %v2272, %v2271
        %vm2281 = vcmask 523264
        %v2283 = vsel %vm2281, %v2244, 0
        %2285 = vmatpush.bf16.msra.mxu0 0
        %2286 = vmatpush.bf16.msra.mxu0 0
        %2287 = vmatpush.bf16.msra.mxu0 0
        %2288 = vmatpush.bf16.msra.mxu0 0
        %2289 = vmatpush.bf16.msra.mxu0 %v2276
        %2290 = vmatpush.bf16.msra.mxu0 %v2275
        %2291 = vmatpush.bf16.msra.mxu0 %v2274
        %2292 = vmatpush.bf16.msra.mxu0 %v2273
        %2293 = vmatmul.bf16.gmra.mxu0 %v2283
        %v2294 = vpop.f32.mrf.mxu0
        %v2295 = vadd.f32 %v2255, %v2294
        %v2296 = vpop.f32.mrf.mxu0
        %v2297 = vadd.f32 %v2255, %v2296
        %2298 = vdwg.mxu0
        %v2299 = vadd.f32 %v2108, %v2295
        %v2300 = vadd.f32 %v2109, %v2297
        %2301 = vst.msk [vmem:[%s733] sm:$0xff] %vm753, %v2299
        %2302 = vst.msk [vmem:[%s733 + $0x8] sm:$0xff] %vm753, %v2300
        %s2303 = sand.u32 %s449, 1
        %s2304 = scalar_lea.sflag [#allocation8], %s2303
        %s2305 = sand.u32 %s449, 1
        %s2306 = smul.addr %s2305, 16
        %s2307 = scalar_lea.vmem [#allocation20], %s2306
        // Predicated region
        $region132: #{transformer_encoder.1} parent=91 // pred_check
          %p2308 = pneg %p459
        $region133: #{transformer_encoder.1} parent=91 // pred_check_branch
          %2310 = sbr.rel (%p2308) target = $region135
        $region134: #{transformer_encoder.1} parent=91 // pred_region
          %s2311 = smul.u32 2, %s42
          %2313 = vsyncadd %s2304, 0
          %s2314 = smul.addr %s41, 2
          %s2315 = sadd.s32 %s2311, %s2314
          %s2316 = smul.addr %s2315, 8
          %s2317 = scalar_lea.hbm %s18, %s2316
          %s2318 = sshll.u32 %s2307, 4
          %s2319 = int_to_ptr.vmem [resolvable:$true] %s2318
          %s2320 = sshll.u32 %s2317, 4
          %s2321 = int_to_ptr.hbm [resolvable:$true] %s2320
          %2326 = dma.vmem_to_hbm [thread:$0]  %s2319, 256, %s2321, %s2304, 128, 128, 8
        $region135: #{transformer_encoder.1} parent=91 // pred_fallthru
          _
      $region92: #{transformer_encoder.1} parent=5 // pred_fallthru
        _
      %p2327 = scmp.le.s32.totalorder 2, %s32
      // Predicated region
      $region136: #{transformer_encoder.1} parent=5 // pred_check
        %p2328 = pneg %p2327
      $region137: #{transformer_encoder.1} parent=5 // pred_check_branch
        %2330 = sbr.rel (%p2328) target = $region139
      $region138: #{transformer_encoder.1} parent=5 // pred_region
        %s2331 = ssub.s32 %s32, 2
        // Predicated region
        $region140: #{transformer_encoder.1} parent=138 // pred_check
          %p2332 = pneg %p465
        $region141: #{transformer_encoder.1} parent=138 // pred_check_branch
          %2334 = sbr.rel (%p2332) target = $region143
        $region142: #{transformer_encoder.1} parent=138 // pred_region
          %s2335 = sand.u32 %s450, 1
          %s2336 = scalar_lea.sflag [#allocation8], %s2335
          %s2337 = sand.u32 %s450, 1
          %s2338 = smul.addr %s2337, 16
          %s2339 = scalar_lea.vmem [#allocation20], %s2338
          %2341 = dma.done %s2336, 256
        $region143: #{transformer_encoder.1} parent=138 // pred_fallthru
          _
      $region139: #{transformer_encoder.1} parent=5 // pred_fallthru
        _
    $region6: #{transformer_encoder.1} parent=1 // loop_footer
      %s36 = sadd.s32 1, %s32
    $region7: #{transformer_encoder.1} parent=1 // loop_footer_branch
      %31 = sbr.rel target = $region3
    $region8: #{transformer_encoder.1} parent=1 // loop_exit
      _
    %2342 = vsyncpa [#allocation7], 1
    %s2343 = scalar_lea.sflag [#allocation7], 1
    %2344 = vsyncpa %s2343, 1
    %2345 = vsyncpa [#allocation10], 1
    %2346 = vsyncpa [#allocation13], 1
    %2347 = vsyncpa [#allocation16], 1
    %2348 = vsyncpa [#allocation19], 1
    %2349 = vsyncpa [#allocation8], 1
    %s2350 = scalar_lea.sflag [#allocation8], 1
    %2351 = vsyncpa %s2350, 1

</llo_original>
